<compile_context>
chip_gen: v5e
topology: v5e:2x2
jax: 0.10.0
libtpu: 0.0.40
codegen_flags: <defaults>
</compile_context>

<pallas_src>
import functools

import jax
import jax.numpy as jnp
import numpy as np
from jax.experimental import pallas as pl
from jax.experimental.pallas import tpu as pltpu


# ----------------------------------------------------------------------------
# Pallas kernel: full encoder + decoder forward for one batch block
# ----------------------------------------------------------------------------
def lstmed_kernel(
    x_ref,          # (Bb, T, F)  input sequence block
    enc_wih_ref,    # (F, 4H)     encoder W_ih^T
    enc_whh_ref,    # (H, 4H)     encoder W_hh^T
    enc_b_ref,      # (1, 4H)     encoder b_ih + b_hh
    dec_w_ref,      # (H, 4H)     decoder combined: W_hh^T + Wout^T @ W_ih^T
    dec_b_ref,      # (1, 4H)     decoder combined: b + bout @ W_ih^T
    wout_ref,       # (H, F)      hidden2output weight^T
    bout_ref,       # (1, F)      hidden2output bias
    out_ref,        # (Bb, T, F)  reconstructed sequence block
    latent_ref,     # (Bb, 1, H)  final encoder cell state
    xp_sc,          # VMEM (Bb, T, 4H)  hoisted encoder input projection
    hh_sc,          # VMEM (Bb, T, H)   decoder hidden-state history
):
    Bb, T, F = x_ref.shape
    H = enc_whh_ref.shape[0]

    # Hoist weight / bias loads out of the serial recurrences (read once).
    enc_whh = enc_whh_ref[...]
    dec_w = dec_w_ref[...]
    dec_b = jnp.broadcast_to(dec_b_ref[...], (Bb, 4 * H))   # broadcast once

    # --- encoder input projection, hoisted out of the recurrence -------------
    # One well-shaped (Bb*T, F) @ (F, 4H) matmul; bias folded in here so the
    # per-step encoder work is only h @ W_hh + xproj[t].
    x2d = x_ref[...].reshape(Bb * T, F)
    xp = (
        jnp.dot(x2d, enc_wih_ref[...], preferred_element_type=jnp.float32)
        + enc_b_ref[...]
    )
    xp_sc[...] = xp.reshape(Bb, T, 4 * H)

    def cell(gates, c):
        # Full-width activations (whole (Bb, 4H) tile), then static slices.
        sig = jax.nn.sigmoid(gates)
        tnh = jnp.tanh(gates)
        i_g = sig[:, 0:H]
        f_g = sig[:, H:2 * H]
        g_g = tnh[:, 2 * H:3 * H]
        o_g = sig[:, 3 * H:4 * H]
        c_new = f_g * c + i_g * g_g
        h_new = o_g * jnp.tanh(c_new)
        return h_new, c_new

    unroll = True if T <= 16 else 4

    # --- encoder recurrence (one matmul per serial step) ---------------------
    def enc_step(t, carry):
        h, c = carry
        xp_t = xp_sc[:, pl.ds(t, 1), :][:, 0, :]                    # (Bb, 4H)
        gates = xp_t + jnp.dot(h, enc_whh, preferred_element_type=jnp.float32)
        return cell(gates, c)

    zeros = jnp.zeros((Bb, H), jnp.float32)
    h, c = jax.lax.fori_loop(0, T, enc_step, (zeros, zeros), unroll=unroll)

    # latent = enc_hidden[1][-1]  (final cell state, before decoder mutates it)
    latent_ref[...] = c[:, None, :]

    # --- decoder recurrence (output projection folded into gate weights) -----
    def dec_step(s, carry):
        h, c = carry
        i = T - 1 - s
        # Record the h that produces output[:, i, :]; projection deferred.
        hh_sc[:, pl.ds(i, 1), :] = h[:, None, :]
        gates = jnp.dot(h, dec_w, preferred_element_type=jnp.float32) + dec_b
        return cell(gates, c)

    _ = jax.lax.fori_loop(0, T, dec_step, (h, c), unroll=unroll)

    # --- deferred output projection: one dense matmul + one dense store ------
    y = (
        jnp.dot(hh_sc[...].reshape(Bb * T, H), wout_ref[...],
                preferred_element_type=jnp.float32)
        + bout_ref[...]
    )
    out_ref[...] = y.reshape(Bb, T, F)


# ----------------------------------------------------------------------------
# Wrapper
# ----------------------------------------------------------------------------
def _default_batch_blocks(B):
    # Use both TensorCores on 2-TC chips (v7x); keep one latency-bound pass
    # on single-TC chips. Heuristic; override via batch_blocks=.
    try:
        kind = jax.devices()[0].device_kind.lower()
    except Exception:
        kind = ""
    two_core = "v7" in kind
    return 2 if (two_core and B % 2 == 0) else 1


@functools.partial(jax.jit, static_argnames=("return_latent", "batch_blocks"))
def lstmed_forward(ts_batch, params, return_latent=False, batch_blocks=None):
    x = ts_batch.astype(jnp.float32)
    B, T, F = x.shape
    H = params["enc_whh_t"].shape[0]

    # Fold hidden2output into the decoder gate weights (eval-mode feedback):
    #   gates = y @ W_ih + h @ W_hh + b,   y = h @ Wout + bout
    #         = h @ (W_hh + Wout @ W_ih) + (b + bout @ W_ih)
    dec_w = params["dec_whh_t"] + params["wout_t"] @ params["dec_wih_t"]
    dec_b = params["dec_b"] + params["bout"] @ params["dec_wih_t"]

    nb = batch_blocks if batch_blocks is not None else _default_batch_blocks(B)
    if nb < 1 or B % nb != 0:
        nb = 1
    bblk = B // nb

    def full2(shape):
        return pl.BlockSpec(shape, lambda b: (0, 0))

    out, latent3 = pl.pallas_call(
        lstmed_kernel,
        out_shape=(
            jax.ShapeDtypeStruct((B, T, F), jnp.float32),
            jax.ShapeDtypeStruct((B, 1, H), jnp.float32),
        ),
        grid_spec=pltpu.PrefetchScalarGridSpec(
            num_scalar_prefetch=0,
            grid=(nb,),
            in_specs=[
                pl.BlockSpec((bblk, T, F), lambda b: (b, 0, 0)),   # x
                full2((F, 4 * H)),                                 # enc W_ih^T
                full2((H, 4 * H)),                                 # enc W_hh^T
                full2((1, 4 * H)),                                 # enc bias
                full2((H, 4 * H)),                                 # dec combined W
                full2((1, 4 * H)),                                 # dec combined b
                full2((H, F)),                                     # Wout^T
                full2((1, F)),                                     # bout
            ],
            out_specs=(
                pl.BlockSpec((bblk, T, F), lambda b: (b, 0, 0)),
                pl.BlockSpec((bblk, 1, H), lambda b: (b, 0, 0)),
            ),
            scratch_shapes=[
                pltpu.VMEM((bblk, T, 4 * H), jnp.float32),   # hoisted x-projection
                pltpu.VMEM((bblk, T, H), jnp.float32),       # decoder h history
            ],
        ),
        compiler_params=pltpu.CompilerParams(
            dimension_semantics=("parallel",)),
    )(
        x,
        params["enc_wih_t"], params["enc_whh_t"], params["enc_b"],
        dec_w, dec_b,
        params["wout_t"], params["bout"],
    )
    latent = latent3[:, 0, :]
    return (out, latent) if return_latent else out


# ----------------------------------------------------------------------------
# Deterministic parameter init (shapes match nn.LSTM / nn.Linear with
# n_layers=(1,1), use_bias=(True,True), dropout=(0,0))
# ----------------------------------------------------------------------------
def init_params(key, n_features, hidden_size):
    H, F = hidden_size, n_features
    k = 1.0 / np.sqrt(H)
    keys = jax.random.split(key, 10)

    def u(kk, shape):
        return jax.random.uniform(kk, shape, jnp.float32, minval=-k, maxval=k)

    enc_wih = u(keys[0], (4 * H, F))
    enc_whh = u(keys[1], (4 * H, H))
    enc_b = u(keys[2], (4 * H,)) + u(keys[3], (4 * H,))     # b_ih + b_hh
    dec_wih = u(keys[4], (4 * H, F))
    dec_whh = u(keys[5], (4 * H, H))
    dec_b = u(keys[6], (4 * H,)) + u(keys[7], (4 * H,))
    kl = 1.0 / np.sqrt(H)
    wout = jax.random.uniform(keys[8], (F, H), jnp.float32, minval=-kl, maxval=kl)
    bout = jax.random.uniform(keys[9], (F,), jnp.float32, minval=-kl, maxval=kl)

    return {
        "enc_wih_t": enc_wih.T,                 # (F, 4H)
        "enc_whh_t": enc_whh.T,                 # (H, 4H)
        "enc_b": enc_b[None, :],                # (1, 4H)
        "dec_wih_t": dec_wih.T,                 # (F, 4H)
        "dec_whh_t": dec_whh.T,                 # (H, 4H)
        "dec_b": dec_b[None, :],                # (1, 4H)
        "wout_t": wout.T,                       # (H, F)
        "bout": bout[None, :],                  # (1, F)
    }


# ----------------------------------------------------------------------------
# Pure-JAX reference (unfused f32 math, mirrors the PyTorch module)
# ----------------------------------------------------------------------------
def ref_forward(x, p):
    B, T, F = x.shape
    H = p["enc_whh_t"].shape[0]

    def cell(xt, h, c, wih_t, whh_t, b):
        g = xt @ wih_t + h @ whh_t + b
        i = jax.nn.sigmoid(g[:, :H])
        f = jax.nn.sigmoid(g[:, H:2 * H])
        gg = jnp.tanh(g[:, 2 * H:3 * H])
        o = jax.nn.sigmoid(g[:, 3 * H:])
        c = f * c + i * gg
        h = o * jnp.tanh(c)
        return h, c

    h = jnp.zeros((B, H), jnp.float32)
    c = jnp.zeros((B, H), jnp.float32)
    for t in range(T):
        h, c = cell(x[:, t, :], h, c, p["enc_wih_t"], p["enc_whh_t"], p["enc_b"])
    latent = c
    out = jnp.zeros((B, T, F), jnp.float32)
    for i in reversed(range(T)):
        y = h @ p["wout_t"] + p["bout"]
        out = out.at[:, i, :].set(y)
        h, c = cell(y, h, c, p["dec_wih_t"], p["dec_whh_t"], p["dec_b"])
    return out, latent


# ----------------------------------------------------------------------------
if __name__ == "__main__":
    B, T, F, H = 2, 8, 8, 32   # batch, seq_len, n_features, hidden_size

    key = jax.random.PRNGKey(0)
    k_x, k_p = jax.random.split(key)
    ts_batch = jax.random.normal(k_x, (B, T, F), jnp.float32)
    params = init_params(k_p, n_features=F, hidden_size=H)

    out, latent = lstmed_forward(ts_batch, params, return_latent=True)
    jax.block_until_ready(out)
    jax.block_until_ready(latent)

    out_ref, latent_ref = ref_forward(ts_batch, params)
    np.testing.assert_allclose(np.asarray(out), np.asarray(out_ref),
                               rtol=1e-4, atol=1e-4)
    np.testing.assert_allclose(np.asarray(latent), np.asarray(latent_ref),
                               rtol=1e-4, atol=1e-4)

    print("KERNEL_OK")
</pallas_src>

<mosaic_0001>
module attributes {stable_mosaic.version = 11 : i64} {
  func.func @lstmed_kernel(%arg0: i32, %arg1: memref<2x8x8xf32, #tpu.memory_space<vmem>>, %arg2: memref<8x128xf32, #tpu.memory_space<vmem>>, %arg3: memref<32x128xf32, #tpu.memory_space<vmem>>, %arg4: memref<1x128xf32, #tpu.memory_space<vmem>>, %arg5: memref<32x128xf32, #tpu.memory_space<vmem>>, %arg6: memref<1x128xf32, #tpu.memory_space<vmem>>, %arg7: memref<32x8xf32, #tpu.memory_space<vmem>>, %arg8: memref<1x8xf32, #tpu.memory_space<vmem>>, %arg9: memref<2x8x8xf32, #tpu.memory_space<vmem>>, %arg10: memref<2x1x32xf32, #tpu.memory_space<vmem>>, %arg11: memref<2x8x128xf32, #tpu.memory_space<vmem>>, %arg12: memref<2x8x32xf32, #tpu.memory_space<vmem>>) attributes {dimension_semantics = [#tpu.dimension_semantics<parallel>], iteration_bounds = array<i64: 1>, scalar_prefetch = 0 : i64, scratch_operands = 2 : i64, tpu.core_type = #tpu.core_type<tc>, window_params = [{transform_indices = @transform_0, window_bounds = array<i64: 2, 8, 8>}, {pipeline_mode = #tpu.pipeline_mode<synchronous>, transform_indices = @transform_1, window_bounds = array<i64: 8, 128>}, {pipeline_mode = #tpu.pipeline_mode<synchronous>, transform_indices = @transform_2, window_bounds = array<i64: 32, 128>}, {pipeline_mode = #tpu.pipeline_mode<synchronous>, transform_indices = @transform_3, window_bounds = array<i64: 1, 128>}, {pipeline_mode = #tpu.pipeline_mode<synchronous>, transform_indices = @transform_4, window_bounds = array<i64: 32, 128>}, {pipeline_mode = #tpu.pipeline_mode<synchronous>, transform_indices = @transform_5, window_bounds = array<i64: 1, 128>}, {pipeline_mode = #tpu.pipeline_mode<synchronous>, transform_indices = @transform_6, window_bounds = array<i64: 32, 8>}, {pipeline_mode = #tpu.pipeline_mode<synchronous>, transform_indices = @transform_7, window_bounds = array<i64: 1, 8>}, {transform_indices = @transform_8, window_bounds = array<i64: 2, 8, 8>}, {transform_indices = @transform_9, window_bounds = array<i64: 2, 1, 32>}]} {
    %c0 = arith.constant 0 : index
    %c0_0 = arith.constant 0 : index
    %0 = vector.load %arg3[%c0, %c0_0] : memref<32x128xf32, #tpu.memory_space<vmem>>, vector<32x128xf32>
    %c0_1 = arith.constant 0 : index
    %c0_2 = arith.constant 0 : index
    %1 = vector.load %arg5[%c0_1, %c0_2] : memref<32x128xf32, #tpu.memory_space<vmem>>, vector<32x128xf32>
    %c0_3 = arith.constant 0 : index
    %c0_4 = arith.constant 0 : index
    %2 = vector.load %arg6[%c0_3, %c0_4] : memref<1x128xf32, #tpu.memory_space<vmem>>, vector<1x128xf32>
    %3 = vector.shape_cast %2 : vector<1x128xf32> to vector<1x128xf32>
    %4 = vector.broadcast %3 : vector<1x128xf32> to vector<2x128xf32>
    %c0_5 = arith.constant 0 : index
    %c0_6 = arith.constant 0 : index
    %c0_7 = arith.constant 0 : index
    %5 = vector.load %arg1[%c0_5, %c0_6, %c0_7] : memref<2x8x8xf32, #tpu.memory_space<vmem>>, vector<2x8x8xf32>
    %6 = vector.shape_cast %5 : vector<2x8x8xf32> to vector<16x8xf32>
    %c0_8 = arith.constant 0 : index
    %c0_9 = arith.constant 0 : index
    %7 = vector.load %arg2[%c0_8, %c0_9] : memref<8x128xf32, #tpu.memory_space<vmem>>, vector<8x128xf32>
    %cst = arith.constant dense<0.000000e+00> : vector<16x128xf32>
    %8 = tpu.matmul %6, %7, %cst {dimension_numbers = #tpu.dot_dimension_numbers<[1], [0], [0], [1], [0, 0, 1, 1], [], []>} : vector<16x8xf32>, vector<8x128xf32>, vector<16x128xf32> -> vector<16x128xf32>
    %c0_10 = arith.constant 0 : index
    %c0_11 = arith.constant 0 : index
    %9 = vector.load %arg4[%c0_10, %c0_11] : memref<1x128xf32, #tpu.memory_space<vmem>>, vector<1x128xf32>
    %10 = vector.broadcast %9 : vector<1x128xf32> to vector<16x128xf32>
    %11 = arith.addf %8, %10 : vector<16x128xf32>
    %12 = vector.shape_cast %11 : vector<16x128xf32> to vector<2x8x128xf32>
    %c0_12 = arith.constant 0 : index
    %c0_13 = arith.constant 0 : index
    %c0_14 = arith.constant 0 : index
    %13 = vector.load %arg11[%c0_12, %c0_13, %c0_14] : memref<2x8x128xf32, #tpu.memory_space<vmem>>, vector<2x8x128xf32>
    tpu.vector_store %arg11[%c0_12, %c0_13, %c0_14], %12 {strides = array<i32>} : memref<2x8x128xf32, #tpu.memory_space<vmem>>, vector<2x8x128xf32>,
    %cst_15 = arith.constant 0.000000e+00 : f32
    %14 = vector.broadcast %cst_15 : f32 to vector<2x32xf32>
    %c0_i32 = arith.constant 0 : i32
    %c0_16 = arith.constant 0 : index
    %15 = arith.index_cast %c0_i32 : i32 to index
    %c0_17 = arith.constant 0 : index
    %16 = vector.load %arg11[%c0_16, %15, %c0_17] : memref<2x8x128xf32, #tpu.memory_space<vmem>>, vector<2x1x128xf32>
    %17 = vector.shape_cast %16 : vector<2x1x128xf32> to vector<2x128xf32>
    %cst_18 = arith.constant dense<0.000000e+00> : vector<2x128xf32>
    %18 = tpu.matmul %14, %0, %cst_18 {dimension_numbers = #tpu.dot_dimension_numbers<[1], [0], [0], [1], [0, 0, 1, 1], [], []>} : vector<2x32xf32>, vector<32x128xf32>, vector<2x128xf32> -> vector<2x128xf32>
    %19 = arith.addf %17, %18 : vector<2x128xf32>
    %20 = arith.negf %19 : vector<2x128xf32>
    %21 = math.exp %20 : vector<2x128xf32>
    %cst_19 = arith.constant 1.000000e+00 : f32
    %22 = vector.broadcast %cst_19 : f32 to vector<2x128xf32>
    %23 = arith.addf %22, %21 : vector<2x128xf32>
    %24 = arith.divf %22, %23 : vector<2x128xf32>
    %25 = math.tanh %19 : vector<2x128xf32>
    %26 = vector.extract_strided_slice %24 {offsets = [0, 0], sizes = [2, 32], strides = [1, 1]} : vector<2x128xf32> to vector<2x32xf32>
    %27 = vector.extract_strided_slice %24 {offsets = [0, 32], sizes = [2, 32], strides = [1, 1]} : vector<2x128xf32> to vector<2x32xf32>
    %28 = vector.extract_strided_slice %25 {offsets = [0, 64], sizes = [2, 32], strides = [1, 1]} : vector<2x128xf32> to vector<2x32xf32>
    %29 = vector.extract_strided_slice %24 {offsets = [0, 96], sizes = [2, 32], strides = [1, 1]} : vector<2x128xf32> to vector<2x32xf32>
    %30 = arith.mulf %27, %14 : vector<2x32xf32>
    %31 = arith.mulf %26, %28 : vector<2x32xf32>
    %32 = arith.addf %30, %31 : vector<2x32xf32>
    %33 = math.tanh %32 : vector<2x32xf32>
    %34 = arith.mulf %29, %33 : vector<2x32xf32>
    %c1_i32 = arith.constant 1 : i32
    %c0_20 = arith.constant 0 : index
    %35 = arith.index_cast %c1_i32 : i32 to index
    %c0_21 = arith.constant 0 : index
    %36 = vector.load %arg11[%c0_20, %35, %c0_21] : memref<2x8x128xf32, #tpu.memory_space<vmem>>, vector<2x1x128xf32>
    %37 = vector.shape_cast %36 : vector<2x1x128xf32> to vector<2x128xf32>
    %cst_22 = arith.constant dense<0.000000e+00> : vector<2x128xf32>
    %38 = tpu.matmul %34, %0, %cst_22 {dimension_numbers = #tpu.dot_dimension_numbers<[1], [0], [0], [1], [0, 0, 1, 1], [], []>} : vector<2x32xf32>, vector<32x128xf32>, vector<2x128xf32> -> vector<2x128xf32>
    %39 = arith.addf %37, %38 : vector<2x128xf32>
    %40 = arith.negf %39 : vector<2x128xf32>
    %41 = math.exp %40 : vector<2x128xf32>
    %cst_23 = arith.constant 1.000000e+00 : f32
    %42 = vector.broadcast %cst_23 : f32 to vector<2x128xf32>
    %43 = arith.addf %42, %41 : vector<2x128xf32>
    %44 = arith.divf %42, %43 : vector<2x128xf32>
    %45 = math.tanh %39 : vector<2x128xf32>
    %46 = vector.extract_strided_slice %44 {offsets = [0, 0], sizes = [2, 32], strides = [1, 1]} : vector<2x128xf32> to vector<2x32xf32>
    %47 = vector.extract_strided_slice %44 {offsets = [0, 32], sizes = [2, 32], strides = [1, 1]} : vector<2x128xf32> to vector<2x32xf32>
    %48 = vector.extract_strided_slice %45 {offsets = [0, 64], sizes = [2, 32], strides = [1, 1]} : vector<2x128xf32> to vector<2x32xf32>
    %49 = vector.extract_strided_slice %44 {offsets = [0, 96], sizes = [2, 32], strides = [1, 1]} : vector<2x128xf32> to vector<2x32xf32>
    %50 = arith.mulf %47, %32 : vector<2x32xf32>
    %51 = arith.mulf %46, %48 : vector<2x32xf32>
    %52 = arith.addf %50, %51 : vector<2x32xf32>
    %53 = math.tanh %52 : vector<2x32xf32>
    %54 = arith.mulf %49, %53 : vector<2x32xf32>
    %c2_i32 = arith.constant 2 : i32
    %c0_24 = arith.constant 0 : index
    %55 = arith.index_cast %c2_i32 : i32 to index
    %c0_25 = arith.constant 0 : index
    %56 = vector.load %arg11[%c0_24, %55, %c0_25] : memref<2x8x128xf32, #tpu.memory_space<vmem>>, vector<2x1x128xf32>
    %57 = vector.shape_cast %56 : vector<2x1x128xf32> to vector<2x128xf32>
    %cst_26 = arith.constant dense<0.000000e+00> : vector<2x128xf32>
    %58 = tpu.matmul %54, %0, %cst_26 {dimension_numbers = #tpu.dot_dimension_numbers<[1], [0], [0], [1], [0, 0, 1, 1], [], []>} : vector<2x32xf32>, vector<32x128xf32>, vector<2x128xf32> -> vector<2x128xf32>
    %59 = arith.addf %57, %58 : vector<2x128xf32>
    %60 = arith.negf %59 : vector<2x128xf32>
    %61 = math.exp %60 : vector<2x128xf32>
    %cst_27 = arith.constant 1.000000e+00 : f32
    %62 = vector.broadcast %cst_27 : f32 to vector<2x128xf32>
    %63 = arith.addf %62, %61 : vector<2x128xf32>
    %64 = arith.divf %62, %63 : vector<2x128xf32>
    %65 = math.tanh %59 : vector<2x128xf32>
    %66 = vector.extract_strided_slice %64 {offsets = [0, 0], sizes = [2, 32], strides = [1, 1]} : vector<2x128xf32> to vector<2x32xf32>
    %67 = vector.extract_strided_slice %64 {offsets = [0, 32], sizes = [2, 32], strides = [1, 1]} : vector<2x128xf32> to vector<2x32xf32>
    %68 = vector.extract_strided_slice %65 {offsets = [0, 64], sizes = [2, 32], strides = [1, 1]} : vector<2x128xf32> to vector<2x32xf32>
    %69 = vector.extract_strided_slice %64 {offsets = [0, 96], sizes = [2, 32], strides = [1, 1]} : vector<2x128xf32> to vector<2x32xf32>
    %70 = arith.mulf %67, %52 : vector<2x32xf32>
    %71 = arith.mulf %66, %68 : vector<2x32xf32>
    %72 = arith.addf %70, %71 : vector<2x32xf32>
    %73 = math.tanh %72 : vector<2x32xf32>
    %74 = arith.mulf %69, %73 : vector<2x32xf32>
    %c3_i32 = arith.constant 3 : i32
    %c0_28 = arith.constant 0 : index
    %75 = arith.index_cast %c3_i32 : i32 to index
    %c0_29 = arith.constant 0 : index
    %76 = vector.load %arg11[%c0_28, %75, %c0_29] : memref<2x8x128xf32, #tpu.memory_space<vmem>>, vector<2x1x128xf32>
    %77 = vector.shape_cast %76 : vector<2x1x128xf32> to vector<2x128xf32>
    %cst_30 = arith.constant dense<0.000000e+00> : vector<2x128xf32>
    %78 = tpu.matmul %74, %0, %cst_30 {dimension_numbers = #tpu.dot_dimension_numbers<[1], [0], [0], [1], [0, 0, 1, 1], [], []>} : vector<2x32xf32>, vector<32x128xf32>, vector<2x128xf32> -> vector<2x128xf32>
    %79 = arith.addf %77, %78 : vector<2x128xf32>
    %80 = arith.negf %79 : vector<2x128xf32>
    %81 = math.exp %80 : vector<2x128xf32>
    %cst_31 = arith.constant 1.000000e+00 : f32
    %82 = vector.broadcast %cst_31 : f32 to vector<2x128xf32>
    %83 = arith.addf %82, %81 : vector<2x128xf32>
    %84 = arith.divf %82, %83 : vector<2x128xf32>
    %85 = math.tanh %79 : vector<2x128xf32>
    %86 = vector.extract_strided_slice %84 {offsets = [0, 0], sizes = [2, 32], strides = [1, 1]} : vector<2x128xf32> to vector<2x32xf32>
    %87 = vector.extract_strided_slice %84 {offsets = [0, 32], sizes = [2, 32], strides = [1, 1]} : vector<2x128xf32> to vector<2x32xf32>
    %88 = vector.extract_strided_slice %85 {offsets = [0, 64], sizes = [2, 32], strides = [1, 1]} : vector<2x128xf32> to vector<2x32xf32>
    %89 = vector.extract_strided_slice %84 {offsets = [0, 96], sizes = [2, 32], strides = [1, 1]} : vector<2x128xf32> to vector<2x32xf32>
    %90 = arith.mulf %87, %72 : vector<2x32xf32>
    %91 = arith.mulf %86, %88 : vector<2x32xf32>
    %92 = arith.addf %90, %91 : vector<2x32xf32>
    %93 = math.tanh %92 : vector<2x32xf32>
    %94 = arith.mulf %89, %93 : vector<2x32xf32>
    %c4_i32 = arith.constant 4 : i32
    %c0_32 = arith.constant 0 : index
    %95 = arith.index_cast %c4_i32 : i32 to index
    %c0_33 = arith.constant 0 : index
    %96 = vector.load %arg11[%c0_32, %95, %c0_33] : memref<2x8x128xf32, #tpu.memory_space<vmem>>, vector<2x1x128xf32>
    %97 = vector.shape_cast %96 : vector<2x1x128xf32> to vector<2x128xf32>
    %cst_34 = arith.constant dense<0.000000e+00> : vector<2x128xf32>
    %98 = tpu.matmul %94, %0, %cst_34 {dimension_numbers = #tpu.dot_dimension_numbers<[1], [0], [0], [1], [0, 0, 1, 1], [], []>} : vector<2x32xf32>, vector<32x128xf32>, vector<2x128xf32> -> vector<2x128xf32>
    %99 = arith.addf %97, %98 : vector<2x128xf32>
    %100 = arith.negf %99 : vector<2x128xf32>
    %101 = math.exp %100 : vector<2x128xf32>
    %cst_35 = arith.constant 1.000000e+00 : f32
    %102 = vector.broadcast %cst_35 : f32 to vector<2x128xf32>
    %103 = arith.addf %102, %101 : vector<2x128xf32>
    %104 = arith.divf %102, %103 : vector<2x128xf32>
    %105 = math.tanh %99 : vector<2x128xf32>
    %106 = vector.extract_strided_slice %104 {offsets = [0, 0], sizes = [2, 32], strides = [1, 1]} : vector<2x128xf32> to vector<2x32xf32>
    %107 = vector.extract_strided_slice %104 {offsets = [0, 32], sizes = [2, 32], strides = [1, 1]} : vector<2x128xf32> to vector<2x32xf32>
    %108 = vector.extract_strided_slice %105 {offsets = [0, 64], sizes = [2, 32], strides = [1, 1]} : vector<2x128xf32> to vector<2x32xf32>
    %109 = vector.extract_strided_slice %104 {offsets = [0, 96], sizes = [2, 32], strides = [1, 1]} : vector<2x128xf32> to vector<2x32xf32>
    %110 = arith.mulf %107, %92 : vector<2x32xf32>
    %111 = arith.mulf %106, %108 : vector<2x32xf32>
    %112 = arith.addf %110, %111 : vector<2x32xf32>
    %113 = math.tanh %112 : vector<2x32xf32>
    %114 = arith.mulf %109, %113 : vector<2x32xf32>
    %c5_i32 = arith.constant 5 : i32
    %c0_36 = arith.constant 0 : index
    %115 = arith.index_cast %c5_i32 : i32 to index
    %c0_37 = arith.constant 0 : index
    %116 = vector.load %arg11[%c0_36, %115, %c0_37] : memref<2x8x128xf32, #tpu.memory_space<vmem>>, vector<2x1x128xf32>
    %117 = vector.shape_cast %116 : vector<2x1x128xf32> to vector<2x128xf32>
    %cst_38 = arith.constant dense<0.000000e+00> : vector<2x128xf32>
    %118 = tpu.matmul %114, %0, %cst_38 {dimension_numbers = #tpu.dot_dimension_numbers<[1], [0], [0], [1], [0, 0, 1, 1], [], []>} : vector<2x32xf32>, vector<32x128xf32>, vector<2x128xf32> -> vector<2x128xf32>
    %119 = arith.addf %117, %118 : vector<2x128xf32>
    %120 = arith.negf %119 : vector<2x128xf32>
    %121 = math.exp %120 : vector<2x128xf32>
    %cst_39 = arith.constant 1.000000e+00 : f32
    %122 = vector.broadcast %cst_39 : f32 to vector<2x128xf32>
    %123 = arith.addf %122, %121 : vector<2x128xf32>
    %124 = arith.divf %122, %123 : vector<2x128xf32>
    %125 = math.tanh %119 : vector<2x128xf32>
    %126 = vector.extract_strided_slice %124 {offsets = [0, 0], sizes = [2, 32], strides = [1, 1]} : vector<2x128xf32> to vector<2x32xf32>
    %127 = vector.extract_strided_slice %124 {offsets = [0, 32], sizes = [2, 32], strides = [1, 1]} : vector<2x128xf32> to vector<2x32xf32>
    %128 = vector.extract_strided_slice %125 {offsets = [0, 64], sizes = [2, 32], strides = [1, 1]} : vector<2x128xf32> to vector<2x32xf32>
    %129 = vector.extract_strided_slice %124 {offsets = [0, 96], sizes = [2, 32], strides = [1, 1]} : vector<2x128xf32> to vector<2x32xf32>
    %130 = arith.mulf %127, %112 : vector<2x32xf32>
    %131 = arith.mulf %126, %128 : vector<2x32xf32>
    %132 = arith.addf %130, %131 : vector<2x32xf32>
    %133 = math.tanh %132 : vector<2x32xf32>
    %134 = arith.mulf %129, %133 : vector<2x32xf32>
    %c6_i32 = arith.constant 6 : i32
    %c0_40 = arith.constant 0 : index
    %135 = arith.index_cast %c6_i32 : i32 to index
    %c0_41 = arith.constant 0 : index
    %136 = vector.load %arg11[%c0_40, %135, %c0_41] : memref<2x8x128xf32, #tpu.memory_space<vmem>>, vector<2x1x128xf32>
    %137 = vector.shape_cast %136 : vector<2x1x128xf32> to vector<2x128xf32>
    %cst_42 = arith.constant dense<0.000000e+00> : vector<2x128xf32>
    %138 = tpu.matmul %134, %0, %cst_42 {dimension_numbers = #tpu.dot_dimension_numbers<[1], [0], [0], [1], [0, 0, 1, 1], [], []>} : vector<2x32xf32>, vector<32x128xf32>, vector<2x128xf32> -> vector<2x128xf32>
    %139 = arith.addf %137, %138 : vector<2x128xf32>
    %140 = arith.negf %139 : vector<2x128xf32>
    %141 = math.exp %140 : vector<2x128xf32>
    %cst_43 = arith.constant 1.000000e+00 : f32
    %142 = vector.broadcast %cst_43 : f32 to vector<2x128xf32>
    %143 = arith.addf %142, %141 : vector<2x128xf32>
    %144 = arith.divf %142, %143 : vector<2x128xf32>
    %145 = math.tanh %139 : vector<2x128xf32>
    %146 = vector.extract_strided_slice %144 {offsets = [0, 0], sizes = [2, 32], strides = [1, 1]} : vector<2x128xf32> to vector<2x32xf32>
    %147 = vector.extract_strided_slice %144 {offsets = [0, 32], sizes = [2, 32], strides = [1, 1]} : vector<2x128xf32> to vector<2x32xf32>
    %148 = vector.extract_strided_slice %145 {offsets = [0, 64], sizes = [2, 32], strides = [1, 1]} : vector<2x128xf32> to vector<2x32xf32>
    %149 = vector.extract_strided_slice %144 {offsets = [0, 96], sizes = [2, 32], strides = [1, 1]} : vector<2x128xf32> to vector<2x32xf32>
    %150 = arith.mulf %147, %132 : vector<2x32xf32>
    %151 = arith.mulf %146, %148 : vector<2x32xf32>
    %152 = arith.addf %150, %151 : vector<2x32xf32>
    %153 = math.tanh %152 : vector<2x32xf32>
    %154 = arith.mulf %149, %153 : vector<2x32xf32>
    %c7_i32 = arith.constant 7 : i32
    %c0_44 = arith.constant 0 : index
    %155 = arith.index_cast %c7_i32 : i32 to index
    %c0_45 = arith.constant 0 : index
    %156 = vector.load %arg11[%c0_44, %155, %c0_45] : memref<2x8x128xf32, #tpu.memory_space<vmem>>, vector<2x1x128xf32>
    %157 = vector.shape_cast %156 : vector<2x1x128xf32> to vector<2x128xf32>
    %cst_46 = arith.constant dense<0.000000e+00> : vector<2x128xf32>
    %158 = tpu.matmul %154, %0, %cst_46 {dimension_numbers = #tpu.dot_dimension_numbers<[1], [0], [0], [1], [0, 0, 1, 1], [], []>} : vector<2x32xf32>, vector<32x128xf32>, vector<2x128xf32> -> vector<2x128xf32>
    %159 = arith.addf %157, %158 : vector<2x128xf32>
    %160 = arith.negf %159 : vector<2x128xf32>
    %161 = math.exp %160 : vector<2x128xf32>
    %cst_47 = arith.constant 1.000000e+00 : f32
    %162 = vector.broadcast %cst_47 : f32 to vector<2x128xf32>
    %163 = arith.addf %162, %161 : vector<2x128xf32>
    %164 = arith.divf %162, %163 : vector<2x128xf32>
    %165 = math.tanh %159 : vector<2x128xf32>
    %166 = vector.extract_strided_slice %164 {offsets = [0, 0], sizes = [2, 32], strides = [1, 1]} : vector<2x128xf32> to vector<2x32xf32>
    %167 = vector.extract_strided_slice %164 {offsets = [0, 32], sizes = [2, 32], strides = [1, 1]} : vector<2x128xf32> to vector<2x32xf32>
    %168 = vector.extract_strided_slice %165 {offsets = [0, 64], sizes = [2, 32], strides = [1, 1]} : vector<2x128xf32> to vector<2x32xf32>
    %169 = vector.extract_strided_slice %164 {offsets = [0, 96], sizes = [2, 32], strides = [1, 1]} : vector<2x128xf32> to vector<2x32xf32>
    %170 = arith.mulf %167, %152 : vector<2x32xf32>
    %171 = arith.mulf %166, %168 : vector<2x32xf32>
    %172 = arith.addf %170, %171 : vector<2x32xf32>
    %173 = math.tanh %172 : vector<2x32xf32>
    %174 = arith.mulf %169, %173 : vector<2x32xf32>
    %c8_i32 = arith.constant 8 : i32
    %175 = vector.shape_cast %172 : vector<2x32xf32> to vector<2x1x32xf32>
    %c0_48 = arith.constant 0 : index
    %c0_49 = arith.constant 0 : index
    %c0_50 = arith.constant 0 : index
    %176 = vector.load %arg10[%c0_48, %c0_49, %c0_50] : memref<2x1x32xf32, #tpu.memory_space<vmem>>, vector<2x1x32xf32>
    tpu.vector_store %arg10[%c0_48, %c0_49, %c0_50], %175 {strides = array<i32>} : memref<2x1x32xf32, #tpu.memory_space<vmem>>, vector<2x1x32xf32>,
    %c0_i32_51 = arith.constant 0 : i32
    %c7_i32_52 = arith.constant 7 : i32
    %177 = arith.subi %c7_i32_52, %c0_i32_51 : i32
    %178 = vector.shape_cast %174 : vector<2x32xf32> to vector<2x1x32xf32>
    %c0_53 = arith.constant 0 : index
    %179 = arith.index_cast %177 : i32 to index
    %c0_54 = arith.constant 0 : index
    %180 = vector.load %arg12[%c0_53, %179, %c0_54] : memref<2x8x32xf32, #tpu.memory_space<vmem>>, vector<2x1x32xf32>
    tpu.vector_store %arg12[%c0_53, %179, %c0_54], %178 {strides = array<i32>} : memref<2x8x32xf32, #tpu.memory_space<vmem>>, vector<2x1x32xf32>,
    %cst_55 = arith.constant dense<0.000000e+00> : vector<2x128xf32>
    %181 = tpu.matmul %174, %1, %cst_55 {dimension_numbers = #tpu.dot_dimension_numbers<[1], [0], [0], [1], [0, 0, 1, 1], [], []>} : vector<2x32xf32>, vector<32x128xf32>, vector<2x128xf32> -> vector<2x128xf32>
    %182 = arith.addf %181, %4 : vector<2x128xf32>
    %183 = arith.negf %182 : vector<2x128xf32>
    %184 = math.exp %183 : vector<2x128xf32>
    %cst_56 = arith.constant 1.000000e+00 : f32
    %185 = vector.broadcast %cst_56 : f32 to vector<2x128xf32>
    %186 = arith.addf %185, %184 : vector<2x128xf32>
    %187 = arith.divf %185, %186 : vector<2x128xf32>
    %188 = math.tanh %182 : vector<2x128xf32>
    %189 = vector.extract_strided_slice %187 {offsets = [0, 0], sizes = [2, 32], strides = [1, 1]} : vector<2x128xf32> to vector<2x32xf32>
    %190 = vector.extract_strided_slice %187 {offsets = [0, 32], sizes = [2, 32], strides = [1, 1]} : vector<2x128xf32> to vector<2x32xf32>
    %191 = vector.extract_strided_slice %188 {offsets = [0, 64], sizes = [2, 32], strides = [1, 1]} : vector<2x128xf32> to vector<2x32xf32>
    %192 = vector.extract_strided_slice %187 {offsets = [0, 96], sizes = [2, 32], strides = [1, 1]} : vector<2x128xf32> to vector<2x32xf32>
    %193 = arith.mulf %190, %172 : vector<2x32xf32>
    %194 = arith.mulf %189, %191 : vector<2x32xf32>
    %195 = arith.addf %193, %194 : vector<2x32xf32>
    %196 = math.tanh %195 : vector<2x32xf32>
    %197 = arith.mulf %192, %196 : vector<2x32xf32>
    %c1_i32_57 = arith.constant 1 : i32
    %c7_i32_58 = arith.constant 7 : i32
    %198 = arith.subi %c7_i32_58, %c1_i32_57 : i32
    %199 = vector.shape_cast %197 : vector<2x32xf32> to vector<2x1x32xf32>
    %c0_59 = arith.constant 0 : index
    %200 = arith.index_cast %198 : i32 to index
    %c0_60 = arith.constant 0 : index
    %201 = vector.load %arg12[%c0_59, %200, %c0_60] : memref<2x8x32xf32, #tpu.memory_space<vmem>>, vector<2x1x32xf32>
    tpu.vector_store %arg12[%c0_59, %200, %c0_60], %199 {strides = array<i32>} : memref<2x8x32xf32, #tpu.memory_space<vmem>>, vector<2x1x32xf32>,
    %cst_61 = arith.constant dense<0.000000e+00> : vector<2x128xf32>
    %202 = tpu.matmul %197, %1, %cst_61 {dimension_numbers = #tpu.dot_dimension_numbers<[1], [0], [0], [1], [0, 0, 1, 1], [], []>} : vector<2x32xf32>, vector<32x128xf32>, vector<2x128xf32> -> vector<2x128xf32>
    %203 = arith.addf %202, %4 : vector<2x128xf32>
    %204 = arith.negf %203 : vector<2x128xf32>
    %205 = math.exp %204 : vector<2x128xf32>
    %cst_62 = arith.constant 1.000000e+00 : f32
    %206 = vector.broadcast %cst_62 : f32 to vector<2x128xf32>
    %207 = arith.addf %206, %205 : vector<2x128xf32>
    %208 = arith.divf %206, %207 : vector<2x128xf32>
    %209 = math.tanh %203 : vector<2x128xf32>
    %210 = vector.extract_strided_slice %208 {offsets = [0, 0], sizes = [2, 32], strides = [1, 1]} : vector<2x128xf32> to vector<2x32xf32>
    %211 = vector.extract_strided_slice %208 {offsets = [0, 32], sizes = [2, 32], strides = [1, 1]} : vector<2x128xf32> to vector<2x32xf32>
    %212 = vector.extract_strided_slice %209 {offsets = [0, 64], sizes = [2, 32], strides = [1, 1]} : vector<2x128xf32> to vector<2x32xf32>
    %213 = vector.extract_strided_slice %208 {offsets = [0, 96], sizes = [2, 32], strides = [1, 1]} : vector<2x128xf32> to vector<2x32xf32>
    %214 = arith.mulf %211, %195 : vector<2x32xf32>
    %215 = arith.mulf %210, %212 : vector<2x32xf32>
    %216 = arith.addf %214, %215 : vector<2x32xf32>
    %217 = math.tanh %216 : vector<2x32xf32>
    %218 = arith.mulf %213, %217 : vector<2x32xf32>
    %c2_i32_63 = arith.constant 2 : i32
    %c7_i32_64 = arith.constant 7 : i32
    %219 = arith.subi %c7_i32_64, %c2_i32_63 : i32
    %220 = vector.shape_cast %218 : vector<2x32xf32> to vector<2x1x32xf32>
    %c0_65 = arith.constant 0 : index
    %221 = arith.index_cast %219 : i32 to index
    %c0_66 = arith.constant 0 : index
    %222 = vector.load %arg12[%c0_65, %221, %c0_66] : memref<2x8x32xf32, #tpu.memory_space<vmem>>, vector<2x1x32xf32>
    tpu.vector_store %arg12[%c0_65, %221, %c0_66], %220 {strides = array<i32>} : memref<2x8x32xf32, #tpu.memory_space<vmem>>, vector<2x1x32xf32>,
    %cst_67 = arith.constant dense<0.000000e+00> : vector<2x128xf32>
    %223 = tpu.matmul %218, %1, %cst_67 {dimension_numbers = #tpu.dot_dimension_numbers<[1], [0], [0], [1], [0, 0, 1, 1], [], []>} : vector<2x32xf32>, vector<32x128xf32>, vector<2x128xf32> -> vector<2x128xf32>
    %224 = arith.addf %223, %4 : vector<2x128xf32>
    %225 = arith.negf %224 : vector<2x128xf32>
    %226 = math.exp %225 : vector<2x128xf32>
    %cst_68 = arith.constant 1.000000e+00 : f32
    %227 = vector.broadcast %cst_68 : f32 to vector<2x128xf32>
    %228 = arith.addf %227, %226 : vector<2x128xf32>
    %229 = arith.divf %227, %228 : vector<2x128xf32>
    %230 = math.tanh %224 : vector<2x128xf32>
    %231 = vector.extract_strided_slice %229 {offsets = [0, 0], sizes = [2, 32], strides = [1, 1]} : vector<2x128xf32> to vector<2x32xf32>
    %232 = vector.extract_strided_slice %229 {offsets = [0, 32], sizes = [2, 32], strides = [1, 1]} : vector<2x128xf32> to vector<2x32xf32>
    %233 = vector.extract_strided_slice %230 {offsets = [0, 64], sizes = [2, 32], strides = [1, 1]} : vector<2x128xf32> to vector<2x32xf32>
    %234 = vector.extract_strided_slice %229 {offsets = [0, 96], sizes = [2, 32], strides = [1, 1]} : vector<2x128xf32> to vector<2x32xf32>
    %235 = arith.mulf %232, %216 : vector<2x32xf32>
    %236 = arith.mulf %231, %233 : vector<2x32xf32>
    %237 = arith.addf %235, %236 : vector<2x32xf32>
    %238 = math.tanh %237 : vector<2x32xf32>
    %239 = arith.mulf %234, %238 : vector<2x32xf32>
    %c3_i32_69 = arith.constant 3 : i32
    %c7_i32_70 = arith.constant 7 : i32
    %240 = arith.subi %c7_i32_70, %c3_i32_69 : i32
    %241 = vector.shape_cast %239 : vector<2x32xf32> to vector<2x1x32xf32>
    %c0_71 = arith.constant 0 : index
    %242 = arith.index_cast %240 : i32 to index
    %c0_72 = arith.constant 0 : index
    %243 = vector.load %arg12[%c0_71, %242, %c0_72] : memref<2x8x32xf32, #tpu.memory_space<vmem>>, vector<2x1x32xf32>
    tpu.vector_store %arg12[%c0_71, %242, %c0_72], %241 {strides = array<i32>} : memref<2x8x32xf32, #tpu.memory_space<vmem>>, vector<2x1x32xf32>,
    %cst_73 = arith.constant dense<0.000000e+00> : vector<2x128xf32>
    %244 = tpu.matmul %239, %1, %cst_73 {dimension_numbers = #tpu.dot_dimension_numbers<[1], [0], [0], [1], [0, 0, 1, 1], [], []>} : vector<2x32xf32>, vector<32x128xf32>, vector<2x128xf32> -> vector<2x128xf32>
    %245 = arith.addf %244, %4 : vector<2x128xf32>
    %246 = arith.negf %245 : vector<2x128xf32>
    %247 = math.exp %246 : vector<2x128xf32>
    %cst_74 = arith.constant 1.000000e+00 : f32
    %248 = vector.broadcast %cst_74 : f32 to vector<2x128xf32>
    %249 = arith.addf %248, %247 : vector<2x128xf32>
    %250 = arith.divf %248, %249 : vector<2x128xf32>
    %251 = math.tanh %245 : vector<2x128xf32>
    %252 = vector.extract_strided_slice %250 {offsets = [0, 0], sizes = [2, 32], strides = [1, 1]} : vector<2x128xf32> to vector<2x32xf32>
    %253 = vector.extract_strided_slice %250 {offsets = [0, 32], sizes = [2, 32], strides = [1, 1]} : vector<2x128xf32> to vector<2x32xf32>
    %254 = vector.extract_strided_slice %251 {offsets = [0, 64], sizes = [2, 32], strides = [1, 1]} : vector<2x128xf32> to vector<2x32xf32>
    %255 = vector.extract_strided_slice %250 {offsets = [0, 96], sizes = [2, 32], strides = [1, 1]} : vector<2x128xf32> to vector<2x32xf32>
    %256 = arith.mulf %253, %237 : vector<2x32xf32>
    %257 = arith.mulf %252, %254 : vector<2x32xf32>
    %258 = arith.addf %256, %257 : vector<2x32xf32>
    %259 = math.tanh %258 : vector<2x32xf32>
    %260 = arith.mulf %255, %259 : vector<2x32xf32>
    %c4_i32_75 = arith.constant 4 : i32
    %c7_i32_76 = arith.constant 7 : i32
    %261 = arith.subi %c7_i32_76, %c4_i32_75 : i32
    %262 = vector.shape_cast %260 : vector<2x32xf32> to vector<2x1x32xf32>
    %c0_77 = arith.constant 0 : index
    %263 = arith.index_cast %261 : i32 to index
    %c0_78 = arith.constant 0 : index
    %264 = vector.load %arg12[%c0_77, %263, %c0_78] : memref<2x8x32xf32, #tpu.memory_space<vmem>>, vector<2x1x32xf32>
    tpu.vector_store %arg12[%c0_77, %263, %c0_78], %262 {strides = array<i32>} : memref<2x8x32xf32, #tpu.memory_space<vmem>>, vector<2x1x32xf32>,
    %cst_79 = arith.constant dense<0.000000e+00> : vector<2x128xf32>
    %265 = tpu.matmul %260, %1, %cst_79 {dimension_numbers = #tpu.dot_dimension_numbers<[1], [0], [0], [1], [0, 0, 1, 1], [], []>} : vector<2x32xf32>, vector<32x128xf32>, vector<2x128xf32> -> vector<2x128xf32>
    %266 = arith.addf %265, %4 : vector<2x128xf32>
    %267 = arith.negf %266 : vector<2x128xf32>
    %268 = math.exp %267 : vector<2x128xf32>
    %cst_80 = arith.constant 1.000000e+00 : f32
    %269 = vector.broadcast %cst_80 : f32 to vector<2x128xf32>
    %270 = arith.addf %269, %268 : vector<2x128xf32>
    %271 = arith.divf %269, %270 : vector<2x128xf32>
    %272 = math.tanh %266 : vector<2x128xf32>
    %273 = vector.extract_strided_slice %271 {offsets = [0, 0], sizes = [2, 32], strides = [1, 1]} : vector<2x128xf32> to vector<2x32xf32>
    %274 = vector.extract_strided_slice %271 {offsets = [0, 32], sizes = [2, 32], strides = [1, 1]} : vector<2x128xf32> to vector<2x32xf32>
    %275 = vector.extract_strided_slice %272 {offsets = [0, 64], sizes = [2, 32], strides = [1, 1]} : vector<2x128xf32> to vector<2x32xf32>
    %276 = vector.extract_strided_slice %271 {offsets = [0, 96], sizes = [2, 32], strides = [1, 1]} : vector<2x128xf32> to vector<2x32xf32>
    %277 = arith.mulf %274, %258 : vector<2x32xf32>
    %278 = arith.mulf %273, %275 : vector<2x32xf32>
    %279 = arith.addf %277, %278 : vector<2x32xf32>
    %280 = math.tanh %279 : vector<2x32xf32>
    %281 = arith.mulf %276, %280 : vector<2x32xf32>
    %c5_i32_81 = arith.constant 5 : i32
    %c7_i32_82 = arith.constant 7 : i32
    %282 = arith.subi %c7_i32_82, %c5_i32_81 : i32
    %283 = vector.shape_cast %281 : vector<2x32xf32> to vector<2x1x32xf32>
    %c0_83 = arith.constant 0 : index
    %284 = arith.index_cast %282 : i32 to index
    %c0_84 = arith.constant 0 : index
    %285 = vector.load %arg12[%c0_83, %284, %c0_84] : memref<2x8x32xf32, #tpu.memory_space<vmem>>, vector<2x1x32xf32>
    tpu.vector_store %arg12[%c0_83, %284, %c0_84], %283 {strides = array<i32>} : memref<2x8x32xf32, #tpu.memory_space<vmem>>, vector<2x1x32xf32>,
    %cst_85 = arith.constant dense<0.000000e+00> : vector<2x128xf32>
    %286 = tpu.matmul %281, %1, %cst_85 {dimension_numbers = #tpu.dot_dimension_numbers<[1], [0], [0], [1], [0, 0, 1, 1], [], []>} : vector<2x32xf32>, vector<32x128xf32>, vector<2x128xf32> -> vector<2x128xf32>
    %287 = arith.addf %286, %4 : vector<2x128xf32>
    %288 = arith.negf %287 : vector<2x128xf32>
    %289 = math.exp %288 : vector<2x128xf32>
    %cst_86 = arith.constant 1.000000e+00 : f32
    %290 = vector.broadcast %cst_86 : f32 to vector<2x128xf32>
    %291 = arith.addf %290, %289 : vector<2x128xf32>
    %292 = arith.divf %290, %291 : vector<2x128xf32>
    %293 = math.tanh %287 : vector<2x128xf32>
    %294 = vector.extract_strided_slice %292 {offsets = [0, 0], sizes = [2, 32], strides = [1, 1]} : vector<2x128xf32> to vector<2x32xf32>
    %295 = vector.extract_strided_slice %292 {offsets = [0, 32], sizes = [2, 32], strides = [1, 1]} : vector<2x128xf32> to vector<2x32xf32>
    %296 = vector.extract_strided_slice %293 {offsets = [0, 64], sizes = [2, 32], strides = [1, 1]} : vector<2x128xf32> to vector<2x32xf32>
    %297 = vector.extract_strided_slice %292 {offsets = [0, 96], sizes = [2, 32], strides = [1, 1]} : vector<2x128xf32> to vector<2x32xf32>
    %298 = arith.mulf %295, %279 : vector<2x32xf32>
    %299 = arith.mulf %294, %296 : vector<2x32xf32>
    %300 = arith.addf %298, %299 : vector<2x32xf32>
    %301 = math.tanh %300 : vector<2x32xf32>
    %302 = arith.mulf %297, %301 : vector<2x32xf32>
    %c6_i32_87 = arith.constant 6 : i32
    %c7_i32_88 = arith.constant 7 : i32
    %303 = arith.subi %c7_i32_88, %c6_i32_87 : i32
    %304 = vector.shape_cast %302 : vector<2x32xf32> to vector<2x1x32xf32>
    %c0_89 = arith.constant 0 : index
    %305 = arith.index_cast %303 : i32 to index
    %c0_90 = arith.constant 0 : index
    %306 = vector.load %arg12[%c0_89, %305, %c0_90] : memref<2x8x32xf32, #tpu.memory_space<vmem>>, vector<2x1x32xf32>
    tpu.vector_store %arg12[%c0_89, %305, %c0_90], %304 {strides = array<i32>} : memref<2x8x32xf32, #tpu.memory_space<vmem>>, vector<2x1x32xf32>,
    %cst_91 = arith.constant dense<0.000000e+00> : vector<2x128xf32>
    %307 = tpu.matmul %302, %1, %cst_91 {dimension_numbers = #tpu.dot_dimension_numbers<[1], [0], [0], [1], [0, 0, 1, 1], [], []>} : vector<2x32xf32>, vector<32x128xf32>, vector<2x128xf32> -> vector<2x128xf32>
    %308 = arith.addf %307, %4 : vector<2x128xf32>
    %309 = arith.negf %308 : vector<2x128xf32>
    %310 = math.exp %309 : vector<2x128xf32>
    %cst_92 = arith.constant 1.000000e+00 : f32
    %311 = vector.broadcast %cst_92 : f32 to vector<2x128xf32>
    %312 = arith.addf %311, %310 : vector<2x128xf32>
    %313 = arith.divf %311, %312 : vector<2x128xf32>
    %314 = math.tanh %308 : vector<2x128xf32>
    %315 = vector.extract_strided_slice %313 {offsets = [0, 0], sizes = [2, 32], strides = [1, 1]} : vector<2x128xf32> to vector<2x32xf32>
    %316 = vector.extract_strided_slice %313 {offsets = [0, 32], sizes = [2, 32], strides = [1, 1]} : vector<2x128xf32> to vector<2x32xf32>
    %317 = vector.extract_strided_slice %314 {offsets = [0, 64], sizes = [2, 32], strides = [1, 1]} : vector<2x128xf32> to vector<2x32xf32>
    %318 = vector.extract_strided_slice %313 {offsets = [0, 96], sizes = [2, 32], strides = [1, 1]} : vector<2x128xf32> to vector<2x32xf32>
    %319 = arith.mulf %316, %300 : vector<2x32xf32>
    %320 = arith.mulf %315, %317 : vector<2x32xf32>
    %321 = arith.addf %319, %320 : vector<2x32xf32>
    %322 = math.tanh %321 : vector<2x32xf32>
    %323 = arith.mulf %318, %322 : vector<2x32xf32>
    %c7_i32_93 = arith.constant 7 : i32
    %c7_i32_94 = arith.constant 7 : i32
    %324 = arith.subi %c7_i32_94, %c7_i32_93 : i32
    %325 = vector.shape_cast %323 : vector<2x32xf32> to vector<2x1x32xf32>
    %c0_95 = arith.constant 0 : index
    %326 = arith.index_cast %324 : i32 to index
    %c0_96 = arith.constant 0 : index
    %327 = vector.load %arg12[%c0_95, %326, %c0_96] : memref<2x8x32xf32, #tpu.memory_space<vmem>>, vector<2x1x32xf32>
    tpu.vector_store %arg12[%c0_95, %326, %c0_96], %325 {strides = array<i32>} : memref<2x8x32xf32, #tpu.memory_space<vmem>>, vector<2x1x32xf32>,
    %cst_97 = arith.constant dense<0.000000e+00> : vector<2x128xf32>
    %328 = tpu.matmul %323, %1, %cst_97 {dimension_numbers = #tpu.dot_dimension_numbers<[1], [0], [0], [1], [0, 0, 1, 1], [], []>} : vector<2x32xf32>, vector<32x128xf32>, vector<2x128xf32> -> vector<2x128xf32>
    %329 = arith.addf %328, %4 : vector<2x128xf32>
    %330 = arith.negf %329 : vector<2x128xf32>
    %331 = math.exp %330 : vector<2x128xf32>
    %cst_98 = arith.constant 1.000000e+00 : f32
    %332 = vector.broadcast %cst_98 : f32 to vector<2x128xf32>
    %333 = arith.addf %332, %331 : vector<2x128xf32>
    %334 = arith.divf %332, %333 : vector<2x128xf32>
    %335 = math.tanh %329 : vector<2x128xf32>
    %336 = vector.extract_strided_slice %334 {offsets = [0, 0], sizes = [2, 32], strides = [1, 1]} : vector<2x128xf32> to vector<2x32xf32>
    %337 = vector.extract_strided_slice %334 {offsets = [0, 32], sizes = [2, 32], strides = [1, 1]} : vector<2x128xf32> to vector<2x32xf32>
    %338 = vector.extract_strided_slice %335 {offsets = [0, 64], sizes = [2, 32], strides = [1, 1]} : vector<2x128xf32> to vector<2x32xf32>
    %339 = vector.extract_strided_slice %334 {offsets = [0, 96], sizes = [2, 32], strides = [1, 1]} : vector<2x128xf32> to vector<2x32xf32>
    %340 = arith.mulf %337, %321 : vector<2x32xf32>
    %341 = arith.mulf %336, %338 : vector<2x32xf32>
    %342 = arith.addf %340, %341 : vector<2x32xf32>
    %343 = math.tanh %342 : vector<2x32xf32>
    %344 = arith.mulf %339, %343 : vector<2x32xf32>
    %c8_i32_99 = arith.constant 8 : i32
    %c0_100 = arith.constant 0 : index
    %c0_101 = arith.constant 0 : index
    %c0_102 = arith.constant 0 : index
    %345 = vector.load %arg12[%c0_100, %c0_101, %c0_102] : memref<2x8x32xf32, #tpu.memory_space<vmem>>, vector<2x8x32xf32>
    %346 = vector.shape_cast %345 : vector<2x8x32xf32> to vector<16x32xf32>
    %c0_103 = arith.constant 0 : index
    %c0_104 = arith.constant 0 : index
    %347 = vector.load %arg7[%c0_103, %c0_104] : memref<32x8xf32, #tpu.memory_space<vmem>>, vector<32x8xf32>
    %cst_105 = arith.constant dense<0.000000e+00> : vector<16x8xf32>
    %348 = tpu.matmul %346, %347, %cst_105 {dimension_numbers = #tpu.dot_dimension_numbers<[1], [0], [0], [1], [0, 0, 1, 1], [], []>} : vector<16x32xf32>, vector<32x8xf32>, vector<16x8xf32> -> vector<16x8xf32>
    %c0_106 = arith.constant 0 : index
    %c0_107 = arith.constant 0 : index
    %349 = vector.load %arg8[%c0_106, %c0_107] : memref<1x8xf32, #tpu.memory_space<vmem>>, vector<1x8xf32>
    %350 = vector.broadcast %349 : vector<1x8xf32> to vector<16x8xf32>
    %351 = arith.addf %348, %350 : vector<16x8xf32>
    %352 = vector.shape_cast %351 : vector<16x8xf32> to vector<2x8x8xf32>
    %c0_108 = arith.constant 0 : index
    %c0_109 = arith.constant 0 : index
    %c0_110 = arith.constant 0 : index
    %353 = vector.load %arg9[%c0_108, %c0_109, %c0_110] : memref<2x8x8xf32, #tpu.memory_space<vmem>>, vector<2x8x8xf32>
    tpu.vector_store %arg9[%c0_108, %c0_109, %c0_110], %352 {strides = array<i32>} : memref<2x8x8xf32, #tpu.memory_space<vmem>>, vector<2x8x8xf32>,
    return
  }
  func.func @transform_0(%arg0: i32) -> (i32, i32, i32) {
    %c0_i32 = arith.constant 0 : i32
    %c0_i32_0 = arith.constant 0 : i32
    %c0_i32_1 = arith.constant 0 : i32
    return %arg0, %c0_i32, %c0_i32_0 : i32, i32, i32
  }
  func.func @transform_1(%arg0: i32) -> (i32, i32) {
    %c0_i32 = arith.constant 0 : i32
    %c0_i32_0 = arith.constant 0 : i32
    %c0_i32_1 = arith.constant 0 : i32
    return %c0_i32, %c0_i32_0 : i32, i32
  }
  func.func @transform_2(%arg0: i32) -> (i32, i32) {
    %c0_i32 = arith.constant 0 : i32
    %c0_i32_0 = arith.constant 0 : i32
    %c0_i32_1 = arith.constant 0 : i32
    return %c0_i32, %c0_i32_0 : i32, i32
  }
  func.func @transform_3(%arg0: i32) -> (i32, i32) {
    %c0_i32 = arith.constant 0 : i32
    %c0_i32_0 = arith.constant 0 : i32
    %c0_i32_1 = arith.constant 0 : i32
    return %c0_i32, %c0_i32_0 : i32, i32
  }
  func.func @transform_4(%arg0: i32) -> (i32, i32) {
    %c0_i32 = arith.constant 0 : i32
    %c0_i32_0 = arith.constant 0 : i32
    %c0_i32_1 = arith.constant 0 : i32
    return %c0_i32, %c0_i32_0 : i32, i32
  }
  func.func @transform_5(%arg0: i32) -> (i32, i32) {
    %c0_i32 = arith.constant 0 : i32
    %c0_i32_0 = arith.constant 0 : i32
    %c0_i32_1 = arith.constant 0 : i32
    return %c0_i32, %c0_i32_0 : i32, i32
  }
  func.func @transform_6(%arg0: i32) -> (i32, i32) {
    %c0_i32 = arith.constant 0 : i32
    %c0_i32_0 = arith.constant 0 : i32
    %c0_i32_1 = arith.constant 0 : i32
    return %c0_i32, %c0_i32_0 : i32, i32
  }
  func.func @transform_7(%arg0: i32) -> (i32, i32) {
    %c0_i32 = arith.constant 0 : i32
    %c0_i32_0 = arith.constant 0 : i32
    %c0_i32_1 = arith.constant 0 : i32
    return %c0_i32, %c0_i32_0 : i32, i32
  }
  func.func @transform_8(%arg0: i32) -> (i32, i32, i32) {
    %c0_i32 = arith.constant 0 : i32
    %c0_i32_0 = arith.constant 0 : i32
    %c0_i32_1 = arith.constant 0 : i32
    return %arg0, %c0_i32, %c0_i32_0 : i32, i32, i32
  }
  func.func @transform_9(%arg0: i32) -> (i32, i32, i32) {
    %c0_i32 = arith.constant 0 : i32
    %c0_i32_0 = arith.constant 0 : i32
    %c0_i32_1 = arith.constant 0 : i32
    return %arg0, %c0_i32, %c0_i32_0 : i32, i32, i32
  }
}

</mosaic_0001>

<llo_original>
// kernel: lstmed_forward.1
$region0: #{lstmed_forward.1}
  #allocation0 [shape = 'u32[]', space=smem, size = 0x4, offset = 0x4, fixed_abs, tag = 'smem constant byte address 0x4 - core index']
  #allocation1 [shape = 'u32[72,128]{1,0:T(1,128)}', space=vmem, size = 0x9000, scoped, tag = 'internal scratch']
  #allocation2 [shape = 'f32[2,8,128]{2,1,0:T(8,128)}', space=vmem, size = 0x2000, scoped, tag = 'scratch operand']
  #allocation3 [shape = 'f32[2,8,32]{2,1,0:T(8,128)}', space=vmem, size = 0x2000, scoped, tag = 'scratch operand']
  %s0 = inlined_call_operand.vmem [shape: f32[2,8,8], index: 0, kind: input, shape index: {}]
  %s1 = inlined_call_operand.vmem [shape: f32[8,128], index: 1, kind: input, shape index: {}]
  %s2 = inlined_call_operand.vmem [shape: f32[32,128], index: 2, kind: input, shape index: {}]
  %s3 = inlined_call_operand.vmem [shape: f32[1,128], index: 3, kind: input, shape index: {}]
  %s4 = inlined_call_operand.vmem [shape: f32[32,128], index: 4, kind: input, shape index: {}]
  %s5 = inlined_call_operand.vmem [shape: f32[1,128], index: 5, kind: input, shape index: {}]
  %s6 = inlined_call_operand.vmem [shape: f32[32,8], index: 6, kind: input, shape index: {}]
  %s7 = inlined_call_operand.vmem [shape: f32[1,8], index: 7, kind: input, shape index: {}]
  %s8 = inlined_call_operand.hbm [shape: f32[2,8,8], index: 8, kind: output, shape index: {0}]
  %s9 = inlined_call_operand.hbm [shape: f32[2,1,32], index: 9, kind: output, shape index: {1}]
  %10 = xla_tuple %s8, %s9
  %s11 = sld [smem:[#allocation0]]
  $region50: #{lstmed_forward.1} parent=0
    _
  %s13 = ssub.s32 1, %s11
  %s14 = scalar_select 0, %s13, %s11
  $region1: #{lstmed_forward.1} parent=0
    #allocation4 [shape = 'u8[8192]{0}', space=vmem, size = 0x2000, scoped, tag = 'output window, operand 0, single buffered']
    #allocation5 [shape = 's32[1]{0}', space=sflag, size = 0x4, scoped, tag = 'scoped memory for lstmed_forward.1']
    #allocation6 [shape = 'u8[1024]{0}', space=vmem, size = 0x400, scoped, tag = 'output window, operand 1, single buffered']
    #allocation7 [shape = 's32[1]{0}', space=sflag, size = 0x4, scoped, tag = 'scoped memory for lstmed_forward.1']
    %15 = vsyncpa [#allocation5], 0
    %16 = vsyncpa [#allocation7], 0
    // Predicated region
    $region2: #{lstmed_forward.1} parent=1 // pred_check
      _
    $region3: #{lstmed_forward.1} parent=1 // pred_check_branch
      %18 = sbr.rel (0) target = $region5
    $region4: #{lstmed_forward.1} parent=1 // pred_region
      _
    $region5: #{lstmed_forward.1} parent=1 // pred_fallthru
      _
    // Predicated region
    $region6: #{lstmed_forward.1} parent=1 // pred_check
      _
    $region7: #{lstmed_forward.1} parent=1 // pred_check_branch
      %20 = sbr.rel (0) target = $region9
    $region8: #{lstmed_forward.1} parent=1 // pred_region
      _
    $region9: #{lstmed_forward.1} parent=1 // pred_fallthru
      _
    // Predicated region
    $region10: #{lstmed_forward.1} parent=1 // pred_check
      _
    $region11: #{lstmed_forward.1} parent=1 // pred_check_branch
      %22 = sbr.rel (0) target = $region13
    $region12: #{lstmed_forward.1} parent=1 // pred_region
      _
    $region13: #{lstmed_forward.1} parent=1 // pred_fallthru
      _
    // Predicated region
    $region14: #{lstmed_forward.1} parent=1 // pred_check
      _
    $region15: #{lstmed_forward.1} parent=1 // pred_check_branch
      %24 = sbr.rel (0) target = $region17
    $region16: #{lstmed_forward.1} parent=1 // pred_region
      _
    $region17: #{lstmed_forward.1} parent=1 // pred_fallthru
      _
    // Predicated region
    $region18: #{lstmed_forward.1} parent=1 // pred_check
      _
    $region19: #{lstmed_forward.1} parent=1 // pred_check_branch
      %26 = sbr.rel (0) target = $region21
    $region20: #{lstmed_forward.1} parent=1 // pred_region
      _
    $region21: #{lstmed_forward.1} parent=1 // pred_fallthru
      _
    // Predicated region
    $region22: #{lstmed_forward.1} parent=1 // pred_check
      _
    $region23: #{lstmed_forward.1} parent=1 // pred_check_branch
      %28 = sbr.rel (0) target = $region25
    $region24: #{lstmed_forward.1} parent=1 // pred_region
      _
    $region25: #{lstmed_forward.1} parent=1 // pred_fallthru
      _
    // Predicated region
    $region26: #{lstmed_forward.1} parent=1 // pred_check
      _
    $region27: #{lstmed_forward.1} parent=1 // pred_check_branch
      %30 = sbr.rel (0) target = $region29
    $region28: #{lstmed_forward.1} parent=1 // pred_region
      _
    $region29: #{lstmed_forward.1} parent=1 // pred_fallthru
      _
    // Predicated region
    $region30: #{lstmed_forward.1} parent=1 // pred_check
      _
    $region31: #{lstmed_forward.1} parent=1 // pred_check_branch
      %32 = sbr.rel (0) target = $region33
    $region32: #{lstmed_forward.1} parent=1 // pred_region
      _
    $region33: #{lstmed_forward.1} parent=1 // pred_fallthru
      _
    %v33 = vld [vmem:[%s2] sm:$0xff]
    %v34 = vld [vmem:[%s2 + $0x8] sm:$0xff]
    %v35 = vld [vmem:[%s2 + $0x10] sm:$0xff]
    %v36 = vld [vmem:[%s2 + $0x18] sm:$0xff]
    %v37 = vld [vmem:[%s4] sm:$0xff]
    %v38 = vld [vmem:[%s4 + $0x8] sm:$0xff]
    %v39 = vld [vmem:[%s4 + $0x10] sm:$0xff]
    %v40 = vld [vmem:[%s4 + $0x18] sm:$0xff]
    %v41 = vld [vmem:[%s5] sm:$0x1]
    %v43 = vperm.slane %v41, 0
    %v45 = vld [vmem:[%s0] sm:$0xff]
    %v46 = vld [vmem:[%s0 + $0x8] sm:$0xff]
    %v47 = vld [vmem:[%s1] sm:$0xff]
    %v48 = vld [vmem:[%s3] sm:$0x1]
    %v50 = vperm.slane %v48, 0
    %vm52 = vcmask 64512
    %v54 = vsel %vm52, %v45, 0
    %v57 = vsel %vm52, %v46, 0
    %59 = vmatpush.msra.mxu0 0.0
    %60 = vmatpush.msra.mxu0 0.0
    %61 = vmatpush.msra.mxu0 0.0
    %62 = vmatpush.msra.mxu0 0.0
    %63 = vmatpush.msra.mxu0 0.0
    %64 = vmatpush.msra.mxu0 0.0
    %65 = vmatpush.msra.mxu0 0.0
    %66 = vmatpush.msra.mxu0 0.0
    %67 = vmatpush.msra.mxu0 0.0
    %68 = vmatpush.msra.mxu0 0.0
    %69 = vmatpush.msra.mxu0 0.0
    %70 = vmatpush.msra.mxu0 0.0
    %71 = vmatpush.msra.mxu0 0.0
    %72 = vmatpush.msra.mxu0 0.0
    %73 = vmatpush.msra.mxu0 0.0
    %74 = vmatpush.msra.mxu0 %v47
    %75 = vmatmul.f32.gmra.mxu0 %v54
    %v76 = vpop.f32.mrf.mxu0
    %v77 = vadd.f32 %v50, %v76
    %78 = vmatmul.f32.gmra.mxu0 %v57
    %v79 = vpop.f32.mrf.mxu0
    %v80 = vadd.f32 %v50, %v79
    %81 = vdwg.mxu0
    %82 = vst [vmem:[#allocation2] sm:$0xff] %v77
    %83 = vst [vmem:[#allocation2 + $0x8] sm:$0xff] %v80
    %v84 = vld [vmem:[#allocation2] sm:$0x1]
    %v85 = vld [vmem:[#allocation2 + $0x8] sm:$0x1]
    %vm86 = vcmask 261120
    %v88 = vsel %vm86, 0.0, 0
    %90 = vmatpush.msra.mxu0 0.0
    %91 = vmatpush.msra.mxu0 0.0
    %92 = vmatpush.msra.mxu0 0.0
    %93 = vmatpush.msra.mxu0 0.0
    %94 = vmatpush.msra.mxu0 0.0
    %95 = vmatpush.msra.mxu0 0.0
    %96 = vmatpush.msra.mxu0 0.0
    %97 = vmatpush.msra.mxu0 0.0
    %98 = vmatpush.msra.mxu0 0.0
    %99 = vmatpush.msra.mxu0 0.0
    %100 = vmatpush.msra.mxu0 0.0
    %101 = vmatpush.msra.mxu0 0.0
    %102 = vmatpush.msra.mxu0 %v36
    %103 = vmatpush.msra.mxu0 %v35
    %104 = vmatpush.msra.mxu0 %v34
    %105 = vmatpush.msra.mxu0 %v33
    %106 = vmatmul.f32.gmra.mxu0 %v88
    %v107 = vpop.f32.mrf.mxu0
    %v108 = vadd.f32 0.0, %v107
    %109 = vdwg.mxu0
    %v111 = vrot.slane %v108, 1
    %v114 = vadd.f32 %v84, %v108
    %v115 = vadd.f32 %v85, %v111
    %v116 = vxor.u32 %v114, 2147483648
    %v117 = vxor.u32 %v115, 2147483648
    %v118 = vmul.f32 %v116, 1.442695
    %v119 = vpow.pop %v118
    %v120 = vmul.f32 %v117, 1.442695
    %v121 = vpow.pop %v120
    %v122 = vadd.f32 %v119, 1.0
    %v123 = vadd.f32 %v121, 1.0
    %v124 = vrcp.pop %v122
    %v125 = vmul.f32 %v122, %v124
    %v126 = vsub.f32 1.0, %v125
    %v127 = vmul.f32 %v124, %v126
    %v128 = vadd.f32 %v124, %v127
    %vm129 = vweird.f32 %v122
    %vm130 = vweird.f32 %v124
    %vm131 = vmor %vm129, %vm130
    %v132 = vsel %vm131, %v124, %v128
    %v133 = vand.u32 2147483647, %v122
    %vm134 = vcmp.eq.f32.partialorder %v133, 8.507059e+37
    %v135 = vand.u32 %v122, 2147483648
    %v136 = vor.u32 1.1754944e-38, %v135
    %v137 = vsel %vm134, %v136, %v132
    %v138 = vmul.f32 1.0, %v137
    %v139 = vrcp.pop %v123
    %v140 = vmul.f32 %v123, %v139
    %v141 = vsub.f32 1.0, %v140
    %v142 = vmul.f32 %v139, %v141
    %v143 = vadd.f32 %v139, %v142
    %vm144 = vweird.f32 %v123
    %vm145 = vweird.f32 %v139
    %vm146 = vmor %vm144, %vm145
    %v147 = vsel %vm146, %v139, %v143
    %v148 = vand.u32 2147483647, %v123
    %vm149 = vcmp.eq.f32.partialorder %v148, 8.507059e+37
    %v150 = vand.u32 %v123, 2147483648
    %v151 = vor.u32 1.1754944e-38, %v150
    %v152 = vsel %vm149, %v151, %v147
    %v153 = vmul.f32 1.0, %v152
    %v154 = vtanh.pop %v114
    %v155 = vtanh.pop %v115
    %v156 = vmul.f32 %v138, 0.0
    %v157 = vmul.f32 %v153, 0.0
    %160 = vrot.lane.b32.xlu0 %v154, 64
    %v161 = vpop.permute.xlu0 %160
    %162 = vrot.lane.b32.xlu0 %v155, 64
    %v163 = vpop.permute.xlu0 %162
    %v166 = vmul.f32 %v138, %v161
    %v167 = vmul.f32 %v153, %v163
    %170 = vrot.lane.b32.xlu0 %v166, 32
    %v171 = vpop.permute.xlu0 %170
    %172 = vrot.lane.b32.xlu0 %v167, 32
    %v173 = vpop.permute.xlu0 %172
    %v176 = vadd.f32 %v156, %v171
    %v177 = vadd.f32 %v157, %v173
    %v178 = vtanh.pop %v176
    %v179 = vtanh.pop %v177
    %182 = vrot.lane.b32.xlu0 %v178, 64
    %v183 = vpop.permute.xlu0 %182
    %184 = vrot.lane.b32.xlu0 %v179, 64
    %v185 = vpop.permute.xlu0 %184
    %v188 = vmul.f32 %v138, %v183
    %v189 = vmul.f32 %v153, %v185
    %v190 = vld [vmem:[#allocation2 + $0x1] sm:$0x1]
    %v191 = vld [vmem:[#allocation2 + $0x9] sm:$0x1]
    %v194 = vrot.slane %v189, 7
    %vm195 = vcmask 1041409
    %v196 = vsel %vm195, %v194, %v188
    %197 = vrot.lane.b32.xlu0 %v196, 32
    %v198 = vpop.permute.xlu0 %197
    %v199 = vsel %vm86, %v198, 0
    %201 = vmatpush.msra.mxu0 0.0
    %202 = vmatpush.msra.mxu0 0.0
    %203 = vmatpush.msra.mxu0 0.0
    %204 = vmatpush.msra.mxu0 0.0
    %205 = vmatpush.msra.mxu0 0.0
    %206 = vmatpush.msra.mxu0 0.0
    %207 = vmatpush.msra.mxu0 0.0
    %208 = vmatpush.msra.mxu0 0.0
    %209 = vmatpush.msra.mxu0 0.0
    %210 = vmatpush.msra.mxu0 0.0
    %211 = vmatpush.msra.mxu0 0.0
    %212 = vmatpush.msra.mxu0 0.0
    %213 = vmatpush.msra.mxu0 %v36
    %214 = vmatpush.msra.mxu0 %v35
    %215 = vmatpush.msra.mxu0 %v34
    %216 = vmatpush.msra.mxu0 %v33
    %217 = vmatmul.f32.gmra.mxu0 %v199
    %v218 = vpop.f32.mrf.mxu0
    %v219 = vadd.f32 0.0, %v218
    %220 = vdwg.mxu0
    %v222 = vrot.slane %v219, 1
    %v225 = vadd.f32 %v190, %v219
    %v226 = vadd.f32 %v191, %v222
    %v227 = vxor.u32 %v225, 2147483648
    %v228 = vxor.u32 %v226, 2147483648
    %v229 = vmul.f32 %v227, 1.442695
    %v230 = vpow.pop %v229
    %v231 = vmul.f32 %v228, 1.442695
    %v232 = vpow.pop %v231
    %v233 = vadd.f32 %v230, 1.0
    %v234 = vadd.f32 %v232, 1.0
    %v235 = vrcp.pop %v233
    %v236 = vmul.f32 %v233, %v235
    %v237 = vsub.f32 1.0, %v236
    %v238 = vmul.f32 %v235, %v237
    %v239 = vadd.f32 %v235, %v238
    %vm240 = vweird.f32 %v233
    %vm241 = vweird.f32 %v235
    %vm242 = vmor %vm240, %vm241
    %v243 = vsel %vm242, %v235, %v239
    %v244 = vand.u32 2147483647, %v233
    %vm245 = vcmp.eq.f32.partialorder %v244, 8.507059e+37
    %v246 = vand.u32 %v233, 2147483648
    %v247 = vor.u32 1.1754944e-38, %v246
    %v248 = vsel %vm245, %v247, %v243
    %v249 = vmul.f32 1.0, %v248
    %v250 = vrcp.pop %v234
    %v251 = vmul.f32 %v234, %v250
    %v252 = vsub.f32 1.0, %v251
    %v253 = vmul.f32 %v250, %v252
    %v254 = vadd.f32 %v250, %v253
    %vm255 = vweird.f32 %v234
    %vm256 = vweird.f32 %v250
    %vm257 = vmor %vm255, %vm256
    %v258 = vsel %vm257, %v250, %v254
    %v259 = vand.u32 2147483647, %v234
    %vm260 = vcmp.eq.f32.partialorder %v259, 8.507059e+37
    %v261 = vand.u32 %v234, 2147483648
    %v262 = vor.u32 1.1754944e-38, %v261
    %v263 = vsel %vm260, %v262, %v258
    %v264 = vmul.f32 1.0, %v263
    %v265 = vtanh.pop %v225
    %v266 = vtanh.pop %v226
    %v267 = vmul.f32 %v249, %v176
    %v268 = vmul.f32 %v264, %v177
    %271 = vrot.lane.b32.xlu0 %v265, 64
    %v272 = vpop.permute.xlu0 %271
    %273 = vrot.lane.b32.xlu0 %v266, 64
    %v274 = vpop.permute.xlu0 %273
    %v277 = vmul.f32 %v249, %v272
    %v278 = vmul.f32 %v264, %v274
    %281 = vrot.lane.b32.xlu0 %v277, 32
    %v282 = vpop.permute.xlu0 %281
    %283 = vrot.lane.b32.xlu0 %v278, 32
    %v284 = vpop.permute.xlu0 %283
    %v287 = vadd.f32 %v267, %v282
    %v288 = vadd.f32 %v268, %v284
    %v289 = vtanh.pop %v287
    %v290 = vtanh.pop %v288
    %293 = vrot.lane.b32.xlu0 %v289, 64
    %v294 = vpop.permute.xlu0 %293
    %295 = vrot.lane.b32.xlu0 %v290, 64
    %v296 = vpop.permute.xlu0 %295
    %v299 = vmul.f32 %v249, %v294
    %v300 = vmul.f32 %v264, %v296
    %v301 = vld [vmem:[#allocation2 + $0x2] sm:$0x1]
    %v302 = vld [vmem:[#allocation2 + $0xa] sm:$0x1]
    %v305 = vrot.slane %v300, 7
    %v306 = vsel %vm195, %v305, %v299
    %307 = vrot.lane.b32.xlu0 %v306, 32
    %v308 = vpop.permute.xlu0 %307
    %v309 = vsel %vm86, %v308, 0
    %311 = vmatpush.msra.mxu0 0.0
    %312 = vmatpush.msra.mxu0 0.0
    %313 = vmatpush.msra.mxu0 0.0
    %314 = vmatpush.msra.mxu0 0.0
    %315 = vmatpush.msra.mxu0 0.0
    %316 = vmatpush.msra.mxu0 0.0
    %317 = vmatpush.msra.mxu0 0.0
    %318 = vmatpush.msra.mxu0 0.0
    %319 = vmatpush.msra.mxu0 0.0
    %320 = vmatpush.msra.mxu0 0.0
    %321 = vmatpush.msra.mxu0 0.0
    %322 = vmatpush.msra.mxu0 0.0
    %323 = vmatpush.msra.mxu0 %v36
    %324 = vmatpush.msra.mxu0 %v35
    %325 = vmatpush.msra.mxu0 %v34
    %326 = vmatpush.msra.mxu0 %v33
    %327 = vmatmul.f32.gmra.mxu0 %v309
    %v328 = vpop.f32.mrf.mxu0
    %v329 = vadd.f32 0.0, %v328
    %330 = vdwg.mxu0
    %v332 = vrot.slane %v329, 1
    %v335 = vadd.f32 %v301, %v329
    %v336 = vadd.f32 %v302, %v332
    %v337 = vxor.u32 %v335, 2147483648
    %v338 = vxor.u32 %v336, 2147483648
    %v339 = vmul.f32 %v337, 1.442695
    %v340 = vpow.pop %v339
    %v341 = vmul.f32 %v338, 1.442695
    %v342 = vpow.pop %v341
    %v343 = vadd.f32 %v340, 1.0
    %v344 = vadd.f32 %v342, 1.0
    %v345 = vrcp.pop %v343
    %v346 = vmul.f32 %v343, %v345
    %v347 = vsub.f32 1.0, %v346
    %v348 = vmul.f32 %v345, %v347
    %v349 = vadd.f32 %v345, %v348
    %vm350 = vweird.f32 %v343
    %vm351 = vweird.f32 %v345
    %vm352 = vmor %vm350, %vm351
    %v353 = vsel %vm352, %v345, %v349
    %v354 = vand.u32 2147483647, %v343
    %vm355 = vcmp.eq.f32.partialorder %v354, 8.507059e+37
    %v356 = vand.u32 %v343, 2147483648
    %v357 = vor.u32 1.1754944e-38, %v356
    %v358 = vsel %vm355, %v357, %v353
    %v359 = vmul.f32 1.0, %v358
    %v360 = vrcp.pop %v344
    %v361 = vmul.f32 %v344, %v360
    %v362 = vsub.f32 1.0, %v361
    %v363 = vmul.f32 %v360, %v362
    %v364 = vadd.f32 %v360, %v363
    %vm365 = vweird.f32 %v344
    %vm366 = vweird.f32 %v360
    %vm367 = vmor %vm365, %vm366
    %v368 = vsel %vm367, %v360, %v364
    %v369 = vand.u32 2147483647, %v344
    %vm370 = vcmp.eq.f32.partialorder %v369, 8.507059e+37
    %v371 = vand.u32 %v344, 2147483648
    %v372 = vor.u32 1.1754944e-38, %v371
    %v373 = vsel %vm370, %v372, %v368
    %v374 = vmul.f32 1.0, %v373
    %v375 = vtanh.pop %v335
    %v376 = vtanh.pop %v336
    %v377 = vmul.f32 %v359, %v287
    %v378 = vmul.f32 %v374, %v288
    %381 = vrot.lane.b32.xlu0 %v375, 64
    %v382 = vpop.permute.xlu0 %381
    %383 = vrot.lane.b32.xlu0 %v376, 64
    %v384 = vpop.permute.xlu0 %383
    %v387 = vmul.f32 %v359, %v382
    %v388 = vmul.f32 %v374, %v384
    %391 = vrot.lane.b32.xlu0 %v387, 32
    %v392 = vpop.permute.xlu0 %391
    %393 = vrot.lane.b32.xlu0 %v388, 32
    %v394 = vpop.permute.xlu0 %393
    %v397 = vadd.f32 %v377, %v392
    %v398 = vadd.f32 %v378, %v394
    %v399 = vtanh.pop %v397
    %v400 = vtanh.pop %v398
    %403 = vrot.lane.b32.xlu0 %v399, 64
    %v404 = vpop.permute.xlu0 %403
    %405 = vrot.lane.b32.xlu0 %v400, 64
    %v406 = vpop.permute.xlu0 %405
    %v409 = vmul.f32 %v359, %v404
    %v410 = vmul.f32 %v374, %v406
    %v411 = vld [vmem:[#allocation2 + $0x3] sm:$0x1]
    %v412 = vld [vmem:[#allocation2 + $0xb] sm:$0x1]
    %v415 = vrot.slane %v410, 7
    %v416 = vsel %vm195, %v415, %v409
    %417 = vrot.lane.b32.xlu0 %v416, 32
    %v418 = vpop.permute.xlu0 %417
    %v419 = vsel %vm86, %v418, 0
    %421 = vmatpush.msra.mxu0 0.0
    %422 = vmatpush.msra.mxu0 0.0
    %423 = vmatpush.msra.mxu0 0.0
    %424 = vmatpush.msra.mxu0 0.0
    %425 = vmatpush.msra.mxu0 0.0
    %426 = vmatpush.msra.mxu0 0.0
    %427 = vmatpush.msra.mxu0 0.0
    %428 = vmatpush.msra.mxu0 0.0
    %429 = vmatpush.msra.mxu0 0.0
    %430 = vmatpush.msra.mxu0 0.0
    %431 = vmatpush.msra.mxu0 0.0
    %432 = vmatpush.msra.mxu0 0.0
    %433 = vmatpush.msra.mxu0 %v36
    %434 = vmatpush.msra.mxu0 %v35
    %435 = vmatpush.msra.mxu0 %v34
    %436 = vmatpush.msra.mxu0 %v33
    %437 = vmatmul.f32.gmra.mxu0 %v419
    %v438 = vpop.f32.mrf.mxu0
    %v439 = vadd.f32 0.0, %v438
    %440 = vdwg.mxu0
    %v442 = vrot.slane %v439, 1
    %v445 = vadd.f32 %v411, %v439
    %v446 = vadd.f32 %v412, %v442
    %v447 = vxor.u32 %v445, 2147483648
    %v448 = vxor.u32 %v446, 2147483648
    %v449 = vmul.f32 %v447, 1.442695
    %v450 = vpow.pop %v449
    %v451 = vmul.f32 %v448, 1.442695
    %v452 = vpow.pop %v451
    %v453 = vadd.f32 %v450, 1.0
    %v454 = vadd.f32 %v452, 1.0
    %v455 = vrcp.pop %v453
    %v456 = vmul.f32 %v453, %v455
    %v457 = vsub.f32 1.0, %v456
    %v458 = vmul.f32 %v455, %v457
    %v459 = vadd.f32 %v455, %v458
    %vm460 = vweird.f32 %v453
    %vm461 = vweird.f32 %v455
    %vm462 = vmor %vm460, %vm461
    %v463 = vsel %vm462, %v455, %v459
    %v464 = vand.u32 2147483647, %v453
    %vm465 = vcmp.eq.f32.partialorder %v464, 8.507059e+37
    %v466 = vand.u32 %v453, 2147483648
    %v467 = vor.u32 1.1754944e-38, %v466
    %v468 = vsel %vm465, %v467, %v463
    %v469 = vmul.f32 1.0, %v468
    %v470 = vrcp.pop %v454
    %v471 = vmul.f32 %v454, %v470
    %v472 = vsub.f32 1.0, %v471
    %v473 = vmul.f32 %v470, %v472
    %v474 = vadd.f32 %v470, %v473
    %vm475 = vweird.f32 %v454
    %vm476 = vweird.f32 %v470
    %vm477 = vmor %vm475, %vm476
    %v478 = vsel %vm477, %v470, %v474
    %v479 = vand.u32 2147483647, %v454
    %vm480 = vcmp.eq.f32.partialorder %v479, 8.507059e+37
    %v481 = vand.u32 %v454, 2147483648
    %v482 = vor.u32 1.1754944e-38, %v481
    %v483 = vsel %vm480, %v482, %v478
    %v484 = vmul.f32 1.0, %v483
    %v485 = vtanh.pop %v445
    %v486 = vtanh.pop %v446
    %v487 = vmul.f32 %v469, %v397
    %v488 = vmul.f32 %v484, %v398
    %491 = vrot.lane.b32.xlu0 %v485, 64
    %v492 = vpop.permute.xlu0 %491
    %493 = vrot.lane.b32.xlu0 %v486, 64
    %v494 = vpop.permute.xlu0 %493
    %v497 = vmul.f32 %v469, %v492
    %v498 = vmul.f32 %v484, %v494
    %501 = vrot.lane.b32.xlu0 %v497, 32
    %v502 = vpop.permute.xlu0 %501
    %503 = vrot.lane.b32.xlu0 %v498, 32
    %v504 = vpop.permute.xlu0 %503
    %v507 = vadd.f32 %v487, %v502
    %v508 = vadd.f32 %v488, %v504
    %v509 = vtanh.pop %v507
    %v510 = vtanh.pop %v508
    %513 = vrot.lane.b32.xlu0 %v509, 64
    %v514 = vpop.permute.xlu0 %513
    %515 = vrot.lane.b32.xlu0 %v510, 64
    %v516 = vpop.permute.xlu0 %515
    %v519 = vmul.f32 %v469, %v514
    %v520 = vmul.f32 %v484, %v516
    %v521 = vld [vmem:[#allocation2 + $0x4] sm:$0x1]
    %v522 = vld [vmem:[#allocation2 + $0xc] sm:$0x1]
    %v525 = vrot.slane %v520, 7
    %v526 = vsel %vm195, %v525, %v519
    %527 = vrot.lane.b32.xlu0 %v526, 32
    %v528 = vpop.permute.xlu0 %527
    %v529 = vsel %vm86, %v528, 0
    %531 = vmatpush.msra.mxu0 0.0
    %532 = vmatpush.msra.mxu0 0.0
    %533 = vmatpush.msra.mxu0 0.0
    %534 = vmatpush.msra.mxu0 0.0
    %535 = vmatpush.msra.mxu0 0.0
    %536 = vmatpush.msra.mxu0 0.0
    %537 = vmatpush.msra.mxu0 0.0
    %538 = vmatpush.msra.mxu0 0.0
    %539 = vmatpush.msra.mxu0 0.0
    %540 = vmatpush.msra.mxu0 0.0
    %541 = vmatpush.msra.mxu0 0.0
    %542 = vmatpush.msra.mxu0 0.0
    %543 = vmatpush.msra.mxu0 %v36
    %544 = vmatpush.msra.mxu0 %v35
    %545 = vmatpush.msra.mxu0 %v34
    %546 = vmatpush.msra.mxu0 %v33
    %547 = vmatmul.f32.gmra.mxu0 %v529
    %v548 = vpop.f32.mrf.mxu0
    %v549 = vadd.f32 0.0, %v548
    %550 = vdwg.mxu0
    %v552 = vrot.slane %v549, 1
    %v555 = vadd.f32 %v521, %v549
    %v556 = vadd.f32 %v522, %v552
    %v557 = vxor.u32 %v555, 2147483648
    %v558 = vxor.u32 %v556, 2147483648
    %v559 = vmul.f32 %v557, 1.442695
    %v560 = vpow.pop %v559
    %v561 = vmul.f32 %v558, 1.442695
    %v562 = vpow.pop %v561
    %v563 = vadd.f32 %v560, 1.0
    %v564 = vadd.f32 %v562, 1.0
    %v565 = vrcp.pop %v563
    %v566 = vmul.f32 %v563, %v565
    %v567 = vsub.f32 1.0, %v566
    %v568 = vmul.f32 %v565, %v567
    %v569 = vadd.f32 %v565, %v568
    %vm570 = vweird.f32 %v563
    %vm571 = vweird.f32 %v565
    %vm572 = vmor %vm570, %vm571
    %v573 = vsel %vm572, %v565, %v569
    %v574 = vand.u32 2147483647, %v563
    %vm575 = vcmp.eq.f32.partialorder %v574, 8.507059e+37
    %v576 = vand.u32 %v563, 2147483648
    %v577 = vor.u32 1.1754944e-38, %v576
    %v578 = vsel %vm575, %v577, %v573
    %v579 = vmul.f32 1.0, %v578
    %v580 = vrcp.pop %v564
    %v581 = vmul.f32 %v564, %v580
    %v582 = vsub.f32 1.0, %v581
    %v583 = vmul.f32 %v580, %v582
    %v584 = vadd.f32 %v580, %v583
    %vm585 = vweird.f32 %v564
    %vm586 = vweird.f32 %v580
    %vm587 = vmor %vm585, %vm586
    %v588 = vsel %vm587, %v580, %v584
    %v589 = vand.u32 2147483647, %v564
    %vm590 = vcmp.eq.f32.partialorder %v589, 8.507059e+37
    %v591 = vand.u32 %v564, 2147483648
    %v592 = vor.u32 1.1754944e-38, %v591
    %v593 = vsel %vm590, %v592, %v588
    %v594 = vmul.f32 1.0, %v593
    %v595 = vtanh.pop %v555
    %v596 = vtanh.pop %v556
    %v597 = vmul.f32 %v579, %v507
    %v598 = vmul.f32 %v594, %v508
    %601 = vrot.lane.b32.xlu0 %v595, 64
    %v602 = vpop.permute.xlu0 %601
    %603 = vrot.lane.b32.xlu0 %v596, 64
    %v604 = vpop.permute.xlu0 %603
    %v607 = vmul.f32 %v579, %v602
    %v608 = vmul.f32 %v594, %v604
    %611 = vrot.lane.b32.xlu0 %v607, 32
    %v612 = vpop.permute.xlu0 %611
    %613 = vrot.lane.b32.xlu0 %v608, 32
    %v614 = vpop.permute.xlu0 %613
    %v617 = vadd.f32 %v597, %v612
    %v618 = vadd.f32 %v598, %v614
    %v619 = vtanh.pop %v617
    %v620 = vtanh.pop %v618
    %623 = vrot.lane.b32.xlu0 %v619, 64
    %v624 = vpop.permute.xlu0 %623
    %625 = vrot.lane.b32.xlu0 %v620, 64
    %v626 = vpop.permute.xlu0 %625
    %v629 = vmul.f32 %v579, %v624
    %v630 = vmul.f32 %v594, %v626
    %v631 = vld [vmem:[#allocation2 + $0x5] sm:$0x1]
    %v632 = vld [vmem:[#allocation2 + $0xd] sm:$0x1]
    %v635 = vrot.slane %v630, 7
    %v636 = vsel %vm195, %v635, %v629
    %637 = vrot.lane.b32.xlu0 %v636, 32
    %v638 = vpop.permute.xlu0 %637
    %v639 = vsel %vm86, %v638, 0
    %641 = vmatpush.msra.mxu0 0.0
    %642 = vmatpush.msra.mxu0 0.0
    %643 = vmatpush.msra.mxu0 0.0
    %644 = vmatpush.msra.mxu0 0.0
    %645 = vmatpush.msra.mxu0 0.0
    %646 = vmatpush.msra.mxu0 0.0
    %647 = vmatpush.msra.mxu0 0.0
    %648 = vmatpush.msra.mxu0 0.0
    %649 = vmatpush.msra.mxu0 0.0
    %650 = vmatpush.msra.mxu0 0.0
    %651 = vmatpush.msra.mxu0 0.0
    %652 = vmatpush.msra.mxu0 0.0
    %653 = vmatpush.msra.mxu0 %v36
    %654 = vmatpush.msra.mxu0 %v35
    %655 = vmatpush.msra.mxu0 %v34
    %656 = vmatpush.msra.mxu0 %v33
    %657 = vmatmul.f32.gmra.mxu0 %v639
    %v658 = vpop.f32.mrf.mxu0
    %v659 = vadd.f32 0.0, %v658
    %660 = vdwg.mxu0
    %v662 = vrot.slane %v659, 1
    %v665 = vadd.f32 %v631, %v659
    %v666 = vadd.f32 %v632, %v662
    %v667 = vxor.u32 %v665, 2147483648
    %v668 = vxor.u32 %v666, 2147483648
    %v669 = vmul.f32 %v667, 1.442695
    %v670 = vpow.pop %v669
    %v671 = vmul.f32 %v668, 1.442695
    %v672 = vpow.pop %v671
    %v673 = vadd.f32 %v670, 1.0
    %v674 = vadd.f32 %v672, 1.0
    %v675 = vrcp.pop %v673
    %v676 = vmul.f32 %v673, %v675
    %v677 = vsub.f32 1.0, %v676
    %v678 = vmul.f32 %v675, %v677
    %v679 = vadd.f32 %v675, %v678
    %vm680 = vweird.f32 %v673
    %vm681 = vweird.f32 %v675
    %vm682 = vmor %vm680, %vm681
    %v683 = vsel %vm682, %v675, %v679
    %v684 = vand.u32 2147483647, %v673
    %vm685 = vcmp.eq.f32.partialorder %v684, 8.507059e+37
    %v686 = vand.u32 %v673, 2147483648
    %v687 = vor.u32 1.1754944e-38, %v686
    %v688 = vsel %vm685, %v687, %v683
    %v689 = vmul.f32 1.0, %v688
    %v690 = vrcp.pop %v674
    %v691 = vmul.f32 %v674, %v690
    %v692 = vsub.f32 1.0, %v691
    %v693 = vmul.f32 %v690, %v692
    %v694 = vadd.f32 %v690, %v693
    %vm695 = vweird.f32 %v674
    %vm696 = vweird.f32 %v690
    %vm697 = vmor %vm695, %vm696
    %v698 = vsel %vm697, %v690, %v694
    %v699 = vand.u32 2147483647, %v674
    %vm700 = vcmp.eq.f32.partialorder %v699, 8.507059e+37
    %v701 = vand.u32 %v674, 2147483648
    %v702 = vor.u32 1.1754944e-38, %v701
    %v703 = vsel %vm700, %v702, %v698
    %v704 = vmul.f32 1.0, %v703
    %v705 = vtanh.pop %v665
    %v706 = vtanh.pop %v666
    %v707 = vmul.f32 %v689, %v617
    %v708 = vmul.f32 %v704, %v618
    %711 = vrot.lane.b32.xlu0 %v705, 64
    %v712 = vpop.permute.xlu0 %711
    %713 = vrot.lane.b32.xlu0 %v706, 64
    %v714 = vpop.permute.xlu0 %713
    %v717 = vmul.f32 %v689, %v712
    %v718 = vmul.f32 %v704, %v714
    %721 = vrot.lane.b32.xlu0 %v717, 32
    %v722 = vpop.permute.xlu0 %721
    %723 = vrot.lane.b32.xlu0 %v718, 32
    %v724 = vpop.permute.xlu0 %723
    %v727 = vadd.f32 %v707, %v722
    %v728 = vadd.f32 %v708, %v724
    %v729 = vtanh.pop %v727
    %v730 = vtanh.pop %v728
    %733 = vrot.lane.b32.xlu0 %v729, 64
    %v734 = vpop.permute.xlu0 %733
    %735 = vrot.lane.b32.xlu0 %v730, 64
    %v736 = vpop.permute.xlu0 %735
    %v739 = vmul.f32 %v689, %v734
    %v740 = vmul.f32 %v704, %v736
    %v741 = vld [vmem:[#allocation2 + $0x6] sm:$0x1]
    %v742 = vld [vmem:[#allocation2 + $0xe] sm:$0x1]
    %v745 = vrot.slane %v740, 7
    %v746 = vsel %vm195, %v745, %v739
    %747 = vrot.lane.b32.xlu0 %v746, 32
    %v748 = vpop.permute.xlu0 %747
    %v749 = vsel %vm86, %v748, 0
    %751 = vmatpush.msra.mxu0 0.0
    %752 = vmatpush.msra.mxu0 0.0
    %753 = vmatpush.msra.mxu0 0.0
    %754 = vmatpush.msra.mxu0 0.0
    %755 = vmatpush.msra.mxu0 0.0
    %756 = vmatpush.msra.mxu0 0.0
    %757 = vmatpush.msra.mxu0 0.0
    %758 = vmatpush.msra.mxu0 0.0
    %759 = vmatpush.msra.mxu0 0.0
    %760 = vmatpush.msra.mxu0 0.0
    %761 = vmatpush.msra.mxu0 0.0
    %762 = vmatpush.msra.mxu0 0.0
    %763 = vmatpush.msra.mxu0 %v36
    %764 = vmatpush.msra.mxu0 %v35
    %765 = vmatpush.msra.mxu0 %v34
    %766 = vmatpush.msra.mxu0 %v33
    %767 = vmatmul.f32.gmra.mxu0 %v749
    %v768 = vpop.f32.mrf.mxu0
    %v769 = vadd.f32 0.0, %v768
    %770 = vdwg.mxu0
    %v772 = vrot.slane %v769, 1
    %v775 = vadd.f32 %v741, %v769
    %v776 = vadd.f32 %v742, %v772
    %v777 = vxor.u32 %v775, 2147483648
    %v778 = vxor.u32 %v776, 2147483648
    %v779 = vmul.f32 %v777, 1.442695
    %v780 = vpow.pop %v779
    %v781 = vmul.f32 %v778, 1.442695
    %v782 = vpow.pop %v781
    %v783 = vadd.f32 %v780, 1.0
    %v784 = vadd.f32 %v782, 1.0
    %v785 = vrcp.pop %v783
    %v786 = vmul.f32 %v783, %v785
    %v787 = vsub.f32 1.0, %v786
    %v788 = vmul.f32 %v785, %v787
    %v789 = vadd.f32 %v785, %v788
    %vm790 = vweird.f32 %v783
    %vm791 = vweird.f32 %v785
    %vm792 = vmor %vm790, %vm791
    %v793 = vsel %vm792, %v785, %v789
    %v794 = vand.u32 2147483647, %v783
    %vm795 = vcmp.eq.f32.partialorder %v794, 8.507059e+37
    %v796 = vand.u32 %v783, 2147483648
    %v797 = vor.u32 1.1754944e-38, %v796
    %v798 = vsel %vm795, %v797, %v793
    %v799 = vmul.f32 1.0, %v798
    %v800 = vrcp.pop %v784
    %v801 = vmul.f32 %v784, %v800
    %v802 = vsub.f32 1.0, %v801
    %v803 = vmul.f32 %v800, %v802
    %v804 = vadd.f32 %v800, %v803
    %vm805 = vweird.f32 %v784
    %vm806 = vweird.f32 %v800
    %vm807 = vmor %vm805, %vm806
    %v808 = vsel %vm807, %v800, %v804
    %v809 = vand.u32 2147483647, %v784
    %vm810 = vcmp.eq.f32.partialorder %v809, 8.507059e+37
    %v811 = vand.u32 %v784, 2147483648
    %v812 = vor.u32 1.1754944e-38, %v811
    %v813 = vsel %vm810, %v812, %v808
    %v814 = vmul.f32 1.0, %v813
    %v815 = vtanh.pop %v775
    %v816 = vtanh.pop %v776
    %v817 = vmul.f32 %v799, %v727
    %v818 = vmul.f32 %v814, %v728
    %821 = vrot.lane.b32.xlu0 %v815, 64
    %v822 = vpop.permute.xlu0 %821
    %823 = vrot.lane.b32.xlu0 %v816, 64
    %v824 = vpop.permute.xlu0 %823
    %v827 = vmul.f32 %v799, %v822
    %v828 = vmul.f32 %v814, %v824
    %831 = vrot.lane.b32.xlu0 %v827, 32
    %v832 = vpop.permute.xlu0 %831
    %833 = vrot.lane.b32.xlu0 %v828, 32
    %v834 = vpop.permute.xlu0 %833
    %v837 = vadd.f32 %v817, %v832
    %v838 = vadd.f32 %v818, %v834
    %v839 = vtanh.pop %v837
    %v840 = vtanh.pop %v838
    %843 = vrot.lane.b32.xlu0 %v839, 64
    %v844 = vpop.permute.xlu0 %843
    %845 = vrot.lane.b32.xlu0 %v840, 64
    %v846 = vpop.permute.xlu0 %845
    %v849 = vmul.f32 %v799, %v844
    %v850 = vmul.f32 %v814, %v846
    %v851 = vld [vmem:[#allocation2 + $0x7] sm:$0x1]
    %v852 = vld [vmem:[#allocation2 + $0xf] sm:$0x1]
    %v855 = vrot.slane %v850, 7
    %v856 = vsel %vm195, %v855, %v849
    %857 = vrot.lane.b32.xlu0 %v856, 32
    %v858 = vpop.permute.xlu0 %857
    %v859 = vsel %vm86, %v858, 0
    %861 = vmatpush.msra.mxu0 0.0
    %862 = vmatpush.msra.mxu0 0.0
    %863 = vmatpush.msra.mxu0 0.0
    %864 = vmatpush.msra.mxu0 0.0
    %865 = vmatpush.msra.mxu0 0.0
    %866 = vmatpush.msra.mxu0 0.0
    %867 = vmatpush.msra.mxu0 0.0
    %868 = vmatpush.msra.mxu0 0.0
    %869 = vmatpush.msra.mxu0 0.0
    %870 = vmatpush.msra.mxu0 0.0
    %871 = vmatpush.msra.mxu0 0.0
    %872 = vmatpush.msra.mxu0 0.0
    %873 = vmatpush.msra.mxu0 %v36
    %874 = vmatpush.msra.mxu0 %v35
    %875 = vmatpush.msra.mxu0 %v34
    %876 = vmatpush.msra.mxu0 %v33
    %877 = vmatmul.f32.gmra.mxu0 %v859
    %v878 = vpop.f32.mrf.mxu0
    %v879 = vadd.f32 0.0, %v878
    %880 = vdwg.mxu0
    %v882 = vrot.slane %v879, 1
    %v885 = vadd.f32 %v851, %v879
    %v886 = vadd.f32 %v852, %v882
    %v887 = vxor.u32 %v885, 2147483648
    %v888 = vxor.u32 %v886, 2147483648
    %v889 = vmul.f32 %v887, 1.442695
    %v890 = vpow.pop %v889
    %v891 = vmul.f32 %v888, 1.442695
    %v892 = vpow.pop %v891
    %v893 = vadd.f32 %v890, 1.0
    %v894 = vadd.f32 %v892, 1.0
    %v895 = vrcp.pop %v893
    %v896 = vmul.f32 %v893, %v895
    %v897 = vsub.f32 1.0, %v896
    %v898 = vmul.f32 %v895, %v897
    %v899 = vadd.f32 %v895, %v898
    %vm900 = vweird.f32 %v893
    %vm901 = vweird.f32 %v895
    %vm902 = vmor %vm900, %vm901
    %v903 = vsel %vm902, %v895, %v899
    %v904 = vand.u32 2147483647, %v893
    %vm905 = vcmp.eq.f32.partialorder %v904, 8.507059e+37
    %v906 = vand.u32 %v893, 2147483648
    %v907 = vor.u32 1.1754944e-38, %v906
    %v908 = vsel %vm905, %v907, %v903
    %v909 = vmul.f32 1.0, %v908
    %v910 = vrcp.pop %v894
    %v911 = vmul.f32 %v894, %v910
    %v912 = vsub.f32 1.0, %v911
    %v913 = vmul.f32 %v910, %v912
    %v914 = vadd.f32 %v910, %v913
    %vm915 = vweird.f32 %v894
    %vm916 = vweird.f32 %v910
    %vm917 = vmor %vm915, %vm916
    %v918 = vsel %vm917, %v910, %v914
    %v919 = vand.u32 2147483647, %v894
    %vm920 = vcmp.eq.f32.partialorder %v919, 8.507059e+37
    %v921 = vand.u32 %v894, 2147483648
    %v922 = vor.u32 1.1754944e-38, %v921
    %v923 = vsel %vm920, %v922, %v918
    %v924 = vmul.f32 1.0, %v923
    %v925 = vtanh.pop %v885
    %v926 = vtanh.pop %v886
    %v927 = vmul.f32 %v909, %v837
    %v928 = vmul.f32 %v924, %v838
    %931 = vrot.lane.b32.xlu0 %v925, 64
    %v932 = vpop.permute.xlu0 %931
    %933 = vrot.lane.b32.xlu0 %v926, 64
    %v934 = vpop.permute.xlu0 %933
    %v937 = vmul.f32 %v909, %v932
    %v938 = vmul.f32 %v924, %v934
    %941 = vrot.lane.b32.xlu0 %v937, 32
    %v942 = vpop.permute.xlu0 %941
    %943 = vrot.lane.b32.xlu0 %v938, 32
    %v944 = vpop.permute.xlu0 %943
    %v947 = vadd.f32 %v927, %v942
    %v948 = vadd.f32 %v928, %v944
    %v949 = vtanh.pop %v947
    %v950 = vtanh.pop %v948
    %953 = vrot.lane.b32.xlu0 %v949, 64
    %v954 = vpop.permute.xlu0 %953
    %955 = vrot.lane.b32.xlu0 %v950, 64
    %v956 = vpop.permute.xlu0 %955
    %v959 = vmul.f32 %v909, %v954
    %v960 = vmul.f32 %v924, %v956
    %963 = vrot.lane.b32.xlu0 %v947, 96
    %v964 = vpop.permute.xlu0 %963
    %965 = vrot.lane.b32.xlu0 %v948, 96
    %v966 = vpop.permute.xlu0 %965
    %vm969 = vcmask 253952
    %970 = vst.msk [vmem:[#allocation6] sm:$0x1] %vm969, %v964
    %971 = vst.msk [vmem:[#allocation6 + $0x1] sm:$0x1] %vm969, %v966
    %974 = vrot.lane.b32.xlu0 %v959, 32
    %v975 = vpop.permute.xlu0 %974
    %976 = vrot.lane.b32.xlu0 %v960, 32
    %v977 = vpop.permute.xlu0 %976
    %980 = vst.msk [vmem:[#allocation3 + $0x7] sm:$0x1] %vm969, %v975
    %981 = vst.msk [vmem:[#allocation3 + $0xf] sm:$0x1] %vm969, %v977
    %v982 = vrot.slane %v960, 7
    %v983 = vsel %vm195, %v982, %v959
    %984 = vrot.lane.b32.xlu0 %v983, 32
    %v985 = vpop.permute.xlu0 %984
    %v986 = vsel %vm86, %v985, 0
    %988 = vmatpush.msra.mxu0 0.0
    %989 = vmatpush.msra.mxu0 0.0
    %990 = vmatpush.msra.mxu0 0.0
    %991 = vmatpush.msra.mxu0 0.0
    %992 = vmatpush.msra.mxu0 0.0
    %993 = vmatpush.msra.mxu0 0.0
    %994 = vmatpush.msra.mxu0 0.0
    %995 = vmatpush.msra.mxu0 0.0
    %996 = vmatpush.msra.mxu0 0.0
    %997 = vmatpush.msra.mxu0 0.0
    %998 = vmatpush.msra.mxu0 0.0
    %999 = vmatpush.msra.mxu0 0.0
    %1000 = vmatpush.msra.mxu0 %v40
    %1001 = vmatpush.msra.mxu0 %v39
    %1002 = vmatpush.msra.mxu0 %v38
    %1003 = vmatpush.msra.mxu0 %v37
    %1004 = vmatmul.f32.gmra.mxu0 %v986
    %v1005 = vpop.f32.mrf.mxu0
    %v1006 = vadd.f32 %v43, %v1005
    %1007 = vdwg.mxu0
    %v1008 = vxor.u32 %v1006, 2147483648
    %v1009 = vmul.f32 %v1008, 1.442695
    %v1010 = vpow.pop %v1009
    %v1011 = vadd.f32 %v1010, 1.0
    %v1012 = vrcp.pop %v1011
    %v1013 = vmul.f32 %v1011, %v1012
    %v1014 = vsub.f32 1.0, %v1013
    %v1015 = vmul.f32 %v1012, %v1014
    %v1016 = vadd.f32 %v1012, %v1015
    %vm1017 = vweird.f32 %v1011
    %vm1018 = vweird.f32 %v1012
    %vm1019 = vmor %vm1017, %vm1018
    %v1020 = vsel %vm1019, %v1012, %v1016
    %v1021 = vand.u32 2147483647, %v1011
    %vm1022 = vcmp.eq.f32.partialorder %v1021, 8.507059e+37
    %v1023 = vand.u32 %v1011, 2147483648
    %v1024 = vor.u32 1.1754944e-38, %v1023
    %v1025 = vsel %vm1022, %v1024, %v1020
    %v1026 = vmul.f32 1.0, %v1025
    %v1027 = vtanh.pop %v1006
    %v1028 = vrot.slane %v948, 7
    %v1029 = vsel %vm195, %v1028, %v947
    %v1031 = vmul.f32 %v1026, %v1029
    %1033 = vrot.lane.b32.xlu0 %v1027, 64
    %v1034 = vpop.permute.xlu0 %1033
    %v1036 = vmul.f32 %v1026, %v1034
    %1038 = vrot.lane.b32.xlu0 %v1036, 32
    %v1039 = vpop.permute.xlu0 %1038
    %v1041 = vadd.f32 %v1031, %v1039
    %v1042 = vtanh.pop %v1041
    %1044 = vrot.lane.b32.xlu0 %v1042, 64
    %v1045 = vpop.permute.xlu0 %1044
    %v1047 = vmul.f32 %v1026, %v1045
    %v1049 = vrot.slane %v1047, 1
    %v1050 = vperm.slane %v1047, 0
    %v1051 = vperm.slane %v1049, 0
    %1052 = vrot.lane.b32.xlu0 %v1050, 32
    %v1053 = vpop.permute.xlu0 %1052
    %1054 = vrot.lane.b32.xlu0 %v1051, 32
    %v1055 = vpop.permute.xlu0 %1054
    %1058 = vst.msk [vmem:[#allocation3 + $0x6] sm:$0x1] %vm969, %v1053
    %1059 = vst.msk [vmem:[#allocation3 + $0xe] sm:$0x1] %vm969, %v1055
    %1060 = vrot.lane.b32.xlu0 %v1047, 32
    %v1061 = vpop.permute.xlu0 %1060
    %v1062 = vsel %vm86, %v1061, 0
    %1064 = vmatpush.msra.mxu0 0.0
    %1065 = vmatpush.msra.mxu0 0.0
    %1066 = vmatpush.msra.mxu0 0.0
    %1067 = vmatpush.msra.mxu0 0.0
    %1068 = vmatpush.msra.mxu0 0.0
    %1069 = vmatpush.msra.mxu0 0.0
    %1070 = vmatpush.msra.mxu0 0.0
    %1071 = vmatpush.msra.mxu0 0.0
    %1072 = vmatpush.msra.mxu0 0.0
    %1073 = vmatpush.msra.mxu0 0.0
    %1074 = vmatpush.msra.mxu0 0.0
    %1075 = vmatpush.msra.mxu0 0.0
    %1076 = vmatpush.msra.mxu0 %v40
    %1077 = vmatpush.msra.mxu0 %v39
    %1078 = vmatpush.msra.mxu0 %v38
    %1079 = vmatpush.msra.mxu0 %v37
    %1080 = vmatmul.f32.gmra.mxu0 %v1062
    %v1081 = vpop.f32.mrf.mxu0
    %v1082 = vadd.f32 %v43, %v1081
    %1083 = vdwg.mxu0
    %v1084 = vxor.u32 %v1082, 2147483648
    %v1085 = vmul.f32 %v1084, 1.442695
    %v1086 = vpow.pop %v1085
    %v1087 = vadd.f32 %v1086, 1.0
    %v1088 = vrcp.pop %v1087
    %v1089 = vmul.f32 %v1087, %v1088
    %v1090 = vsub.f32 1.0, %v1089
    %v1091 = vmul.f32 %v1088, %v1090
    %v1092 = vadd.f32 %v1088, %v1091
    %vm1093 = vweird.f32 %v1087
    %vm1094 = vweird.f32 %v1088
    %vm1095 = vmor %vm1093, %vm1094
    %v1096 = vsel %vm1095, %v1088, %v1092
    %v1097 = vand.u32 2147483647, %v1087
    %vm1098 = vcmp.eq.f32.partialorder %v1097, 8.507059e+37
    %v1099 = vand.u32 %v1087, 2147483648
    %v1100 = vor.u32 1.1754944e-38, %v1099
    %v1101 = vsel %vm1098, %v1100, %v1096
    %v1102 = vmul.f32 1.0, %v1101
    %v1103 = vtanh.pop %v1082
    %v1104 = vmul.f32 %v1102, %v1041
    %1106 = vrot.lane.b32.xlu0 %v1103, 64
    %v1107 = vpop.permute.xlu0 %1106
    %v1109 = vmul.f32 %v1102, %v1107
    %1111 = vrot.lane.b32.xlu0 %v1109, 32
    %v1112 = vpop.permute.xlu0 %1111
    %v1114 = vadd.f32 %v1104, %v1112
    %v1115 = vtanh.pop %v1114
    %1117 = vrot.lane.b32.xlu0 %v1115, 64
    %v1118 = vpop.permute.xlu0 %1117
    %v1120 = vmul.f32 %v1102, %v1118
    %v1122 = vrot.slane %v1120, 1
    %v1123 = vperm.slane %v1120, 0
    %v1124 = vperm.slane %v1122, 0
    %1125 = vrot.lane.b32.xlu0 %v1123, 32
    %v1126 = vpop.permute.xlu0 %1125
    %1127 = vrot.lane.b32.xlu0 %v1124, 32
    %v1128 = vpop.permute.xlu0 %1127
    %1131 = vst.msk [vmem:[#allocation3 + $0x5] sm:$0x1] %vm969, %v1126
    %1132 = vst.msk [vmem:[#allocation3 + $0xd] sm:$0x1] %vm969, %v1128
    %1133 = vrot.lane.b32.xlu0 %v1120, 32
    %v1134 = vpop.permute.xlu0 %1133
    %v1135 = vsel %vm86, %v1134, 0
    %1137 = vmatpush.msra.mxu0 0.0
    %1138 = vmatpush.msra.mxu0 0.0
    %1139 = vmatpush.msra.mxu0 0.0
    %1140 = vmatpush.msra.mxu0 0.0
    %1141 = vmatpush.msra.mxu0 0.0
    %1142 = vmatpush.msra.mxu0 0.0
    %1143 = vmatpush.msra.mxu0 0.0
    %1144 = vmatpush.msra.mxu0 0.0
    %1145 = vmatpush.msra.mxu0 0.0
    %1146 = vmatpush.msra.mxu0 0.0
    %1147 = vmatpush.msra.mxu0 0.0
    %1148 = vmatpush.msra.mxu0 0.0
    %1149 = vmatpush.msra.mxu0 %v40
    %1150 = vmatpush.msra.mxu0 %v39
    %1151 = vmatpush.msra.mxu0 %v38
    %1152 = vmatpush.msra.mxu0 %v37
    %1153 = vmatmul.f32.gmra.mxu0 %v1135
    %v1154 = vpop.f32.mrf.mxu0
    %v1155 = vadd.f32 %v43, %v1154
    %1156 = vdwg.mxu0
    %v1157 = vxor.u32 %v1155, 2147483648
    %v1158 = vmul.f32 %v1157, 1.442695
    %v1159 = vpow.pop %v1158
    %v1160 = vadd.f32 %v1159, 1.0
    %v1161 = vrcp.pop %v1160
    %v1162 = vmul.f32 %v1160, %v1161
    %v1163 = vsub.f32 1.0, %v1162
    %v1164 = vmul.f32 %v1161, %v1163
    %v1165 = vadd.f32 %v1161, %v1164
    %vm1166 = vweird.f32 %v1160
    %vm1167 = vweird.f32 %v1161
    %vm1168 = vmor %vm1166, %vm1167
    %v1169 = vsel %vm1168, %v1161, %v1165
    %v1170 = vand.u32 2147483647, %v1160
    %vm1171 = vcmp.eq.f32.partialorder %v1170, 8.507059e+37
    %v1172 = vand.u32 %v1160, 2147483648
    %v1173 = vor.u32 1.1754944e-38, %v1172
    %v1174 = vsel %vm1171, %v1173, %v1169
    %v1175 = vmul.f32 1.0, %v1174
    %v1176 = vtanh.pop %v1155
    %v1177 = vmul.f32 %v1175, %v1114
    %1179 = vrot.lane.b32.xlu0 %v1176, 64
    %v1180 = vpop.permute.xlu0 %1179
    %v1182 = vmul.f32 %v1175, %v1180
    %1184 = vrot.lane.b32.xlu0 %v1182, 32
    %v1185 = vpop.permute.xlu0 %1184
    %v1187 = vadd.f32 %v1177, %v1185
    %v1188 = vtanh.pop %v1187
    %1190 = vrot.lane.b32.xlu0 %v1188, 64
    %v1191 = vpop.permute.xlu0 %1190
    %v1193 = vmul.f32 %v1175, %v1191
    %v1195 = vrot.slane %v1193, 1
    %v1196 = vperm.slane %v1193, 0
    %v1197 = vperm.slane %v1195, 0
    %1198 = vrot.lane.b32.xlu0 %v1196, 32
    %v1199 = vpop.permute.xlu0 %1198
    %1200 = vrot.lane.b32.xlu0 %v1197, 32
    %v1201 = vpop.permute.xlu0 %1200
    %1204 = vst.msk [vmem:[#allocation3 + $0x4] sm:$0x1] %vm969, %v1199
    %1205 = vst.msk [vmem:[#allocation3 + $0xc] sm:$0x1] %vm969, %v1201
    %1206 = vrot.lane.b32.xlu0 %v1193, 32
    %v1207 = vpop.permute.xlu0 %1206
    %v1208 = vsel %vm86, %v1207, 0
    %1210 = vmatpush.msra.mxu0 0.0
    %1211 = vmatpush.msra.mxu0 0.0
    %1212 = vmatpush.msra.mxu0 0.0
    %1213 = vmatpush.msra.mxu0 0.0
    %1214 = vmatpush.msra.mxu0 0.0
    %1215 = vmatpush.msra.mxu0 0.0
    %1216 = vmatpush.msra.mxu0 0.0
    %1217 = vmatpush.msra.mxu0 0.0
    %1218 = vmatpush.msra.mxu0 0.0
    %1219 = vmatpush.msra.mxu0 0.0
    %1220 = vmatpush.msra.mxu0 0.0
    %1221 = vmatpush.msra.mxu0 0.0
    %1222 = vmatpush.msra.mxu0 %v40
    %1223 = vmatpush.msra.mxu0 %v39
    %1224 = vmatpush.msra.mxu0 %v38
    %1225 = vmatpush.msra.mxu0 %v37
    %1226 = vmatmul.f32.gmra.mxu0 %v1208
    %v1227 = vpop.f32.mrf.mxu0
    %v1228 = vadd.f32 %v43, %v1227
    %1229 = vdwg.mxu0
    %v1230 = vxor.u32 %v1228, 2147483648
    %v1231 = vmul.f32 %v1230, 1.442695
    %v1232 = vpow.pop %v1231
    %v1233 = vadd.f32 %v1232, 1.0
    %v1234 = vrcp.pop %v1233
    %v1235 = vmul.f32 %v1233, %v1234
    %v1236 = vsub.f32 1.0, %v1235
    %v1237 = vmul.f32 %v1234, %v1236
    %v1238 = vadd.f32 %v1234, %v1237
    %vm1239 = vweird.f32 %v1233
    %vm1240 = vweird.f32 %v1234
    %vm1241 = vmor %vm1239, %vm1240
    %v1242 = vsel %vm1241, %v1234, %v1238
    %v1243 = vand.u32 2147483647, %v1233
    %vm1244 = vcmp.eq.f32.partialorder %v1243, 8.507059e+37
    %v1245 = vand.u32 %v1233, 2147483648
    %v1246 = vor.u32 1.1754944e-38, %v1245
    %v1247 = vsel %vm1244, %v1246, %v1242
    %v1248 = vmul.f32 1.0, %v1247
    %v1249 = vtanh.pop %v1228
    %v1250 = vmul.f32 %v1248, %v1187
    %1252 = vrot.lane.b32.xlu0 %v1249, 64
    %v1253 = vpop.permute.xlu0 %1252
    %v1255 = vmul.f32 %v1248, %v1253
    %1257 = vrot.lane.b32.xlu0 %v1255, 32
    %v1258 = vpop.permute.xlu0 %1257
    %v1260 = vadd.f32 %v1250, %v1258
    %v1261 = vtanh.pop %v1260
    %1263 = vrot.lane.b32.xlu0 %v1261, 64
    %v1264 = vpop.permute.xlu0 %1263
    %v1266 = vmul.f32 %v1248, %v1264
    %v1268 = vrot.slane %v1266, 1
    %v1269 = vperm.slane %v1266, 0
    %v1270 = vperm.slane %v1268, 0
    %1271 = vrot.lane.b32.xlu0 %v1269, 32
    %v1272 = vpop.permute.xlu0 %1271
    %1273 = vrot.lane.b32.xlu0 %v1270, 32
    %v1274 = vpop.permute.xlu0 %1273
    %1277 = vst.msk [vmem:[#allocation3 + $0x3] sm:$0x1] %vm969, %v1272
    %1278 = vst.msk [vmem:[#allocation3 + $0xb] sm:$0x1] %vm969, %v1274
    %1279 = vrot.lane.b32.xlu0 %v1266, 32
    %v1280 = vpop.permute.xlu0 %1279
    %v1281 = vsel %vm86, %v1280, 0
    %1283 = vmatpush.msra.mxu0 0.0
    %1284 = vmatpush.msra.mxu0 0.0
    %1285 = vmatpush.msra.mxu0 0.0
    %1286 = vmatpush.msra.mxu0 0.0
    %1287 = vmatpush.msra.mxu0 0.0
    %1288 = vmatpush.msra.mxu0 0.0
    %1289 = vmatpush.msra.mxu0 0.0
    %1290 = vmatpush.msra.mxu0 0.0
    %1291 = vmatpush.msra.mxu0 0.0
    %1292 = vmatpush.msra.mxu0 0.0
    %1293 = vmatpush.msra.mxu0 0.0
    %1294 = vmatpush.msra.mxu0 0.0
    %1295 = vmatpush.msra.mxu0 %v40
    %1296 = vmatpush.msra.mxu0 %v39
    %1297 = vmatpush.msra.mxu0 %v38
    %1298 = vmatpush.msra.mxu0 %v37
    %1299 = vmatmul.f32.gmra.mxu0 %v1281
    %v1300 = vpop.f32.mrf.mxu0
    %v1301 = vadd.f32 %v43, %v1300
    %1302 = vdwg.mxu0
    %v1303 = vxor.u32 %v1301, 2147483648
    %v1304 = vmul.f32 %v1303, 1.442695
    %v1305 = vpow.pop %v1304
    %v1306 = vadd.f32 %v1305, 1.0
    %v1307 = vrcp.pop %v1306
    %v1308 = vmul.f32 %v1306, %v1307
    %v1309 = vsub.f32 1.0, %v1308
    %v1310 = vmul.f32 %v1307, %v1309
    %v1311 = vadd.f32 %v1307, %v1310
    %vm1312 = vweird.f32 %v1306
    %vm1313 = vweird.f32 %v1307
    %vm1314 = vmor %vm1312, %vm1313
    %v1315 = vsel %vm1314, %v1307, %v1311
    %v1316 = vand.u32 2147483647, %v1306
    %vm1317 = vcmp.eq.f32.partialorder %v1316, 8.507059e+37
    %v1318 = vand.u32 %v1306, 2147483648
    %v1319 = vor.u32 1.1754944e-38, %v1318
    %v1320 = vsel %vm1317, %v1319, %v1315
    %v1321 = vmul.f32 1.0, %v1320
    %v1322 = vtanh.pop %v1301
    %v1323 = vmul.f32 %v1321, %v1260
    %1325 = vrot.lane.b32.xlu0 %v1322, 64
    %v1326 = vpop.permute.xlu0 %1325
    %v1328 = vmul.f32 %v1321, %v1326
    %1330 = vrot.lane.b32.xlu0 %v1328, 32
    %v1331 = vpop.permute.xlu0 %1330
    %v1333 = vadd.f32 %v1323, %v1331
    %v1334 = vtanh.pop %v1333
    %1336 = vrot.lane.b32.xlu0 %v1334, 64
    %v1337 = vpop.permute.xlu0 %1336
    %v1339 = vmul.f32 %v1321, %v1337
    %v1341 = vrot.slane %v1339, 1
    %v1342 = vperm.slane %v1339, 0
    %v1343 = vperm.slane %v1341, 0
    %1344 = vrot.lane.b32.xlu0 %v1342, 32
    %v1345 = vpop.permute.xlu0 %1344
    %1346 = vrot.lane.b32.xlu0 %v1343, 32
    %v1347 = vpop.permute.xlu0 %1346
    %1350 = vst.msk [vmem:[#allocation3 + $0x2] sm:$0x1] %vm969, %v1345
    %1351 = vst.msk [vmem:[#allocation3 + $0xa] sm:$0x1] %vm969, %v1347
    %1352 = vrot.lane.b32.xlu0 %v1339, 32
    %v1353 = vpop.permute.xlu0 %1352
    %v1354 = vsel %vm86, %v1353, 0
    %1356 = vmatpush.msra.mxu0 0.0
    %1357 = vmatpush.msra.mxu0 0.0
    %1358 = vmatpush.msra.mxu0 0.0
    %1359 = vmatpush.msra.mxu0 0.0
    %1360 = vmatpush.msra.mxu0 0.0
    %1361 = vmatpush.msra.mxu0 0.0
    %1362 = vmatpush.msra.mxu0 0.0
    %1363 = vmatpush.msra.mxu0 0.0
    %1364 = vmatpush.msra.mxu0 0.0
    %1365 = vmatpush.msra.mxu0 0.0
    %1366 = vmatpush.msra.mxu0 0.0
    %1367 = vmatpush.msra.mxu0 0.0
    %1368 = vmatpush.msra.mxu0 %v40
    %1369 = vmatpush.msra.mxu0 %v39
    %1370 = vmatpush.msra.mxu0 %v38
    %1371 = vmatpush.msra.mxu0 %v37
    %1372 = vmatmul.f32.gmra.mxu0 %v1354
    %v1373 = vpop.f32.mrf.mxu0
    %v1374 = vadd.f32 %v43, %v1373
    %1375 = vdwg.mxu0
    %v1376 = vxor.u32 %v1374, 2147483648
    %v1377 = vmul.f32 %v1376, 1.442695
    %v1378 = vpow.pop %v1377
    %v1379 = vadd.f32 %v1378, 1.0
    %v1380 = vrcp.pop %v1379
    %v1381 = vmul.f32 %v1379, %v1380
    %v1382 = vsub.f32 1.0, %v1381
    %v1383 = vmul.f32 %v1380, %v1382
    %v1384 = vadd.f32 %v1380, %v1383
    %vm1385 = vweird.f32 %v1379
    %vm1386 = vweird.f32 %v1380
    %vm1387 = vmor %vm1385, %vm1386
    %v1388 = vsel %vm1387, %v1380, %v1384
    %v1389 = vand.u32 2147483647, %v1379
    %vm1390 = vcmp.eq.f32.partialorder %v1389, 8.507059e+37
    %v1391 = vand.u32 %v1379, 2147483648
    %v1392 = vor.u32 1.1754944e-38, %v1391
    %v1393 = vsel %vm1390, %v1392, %v1388
    %v1394 = vmul.f32 1.0, %v1393
    %v1395 = vtanh.pop %v1374
    %v1396 = vmul.f32 %v1394, %v1333
    %1398 = vrot.lane.b32.xlu0 %v1395, 64
    %v1399 = vpop.permute.xlu0 %1398
    %v1401 = vmul.f32 %v1394, %v1399
    %1403 = vrot.lane.b32.xlu0 %v1401, 32
    %v1404 = vpop.permute.xlu0 %1403
    %v1406 = vadd.f32 %v1396, %v1404
    %v1407 = vtanh.pop %v1406
    %1409 = vrot.lane.b32.xlu0 %v1407, 64
    %v1410 = vpop.permute.xlu0 %1409
    %v1412 = vmul.f32 %v1394, %v1410
    %v1414 = vrot.slane %v1412, 1
    %v1415 = vperm.slane %v1412, 0
    %v1416 = vperm.slane %v1414, 0
    %1417 = vrot.lane.b32.xlu0 %v1415, 32
    %v1418 = vpop.permute.xlu0 %1417
    %1419 = vrot.lane.b32.xlu0 %v1416, 32
    %v1420 = vpop.permute.xlu0 %1419
    %1423 = vst.msk [vmem:[#allocation3 + $0x1] sm:$0x1] %vm969, %v1418
    %1424 = vst.msk [vmem:[#allocation3 + $0x9] sm:$0x1] %vm969, %v1420
    %1425 = vrot.lane.b32.xlu0 %v1412, 32
    %v1426 = vpop.permute.xlu0 %1425
    %v1427 = vsel %vm86, %v1426, 0
    %1429 = vmatpush.msra.mxu0 0.0
    %1430 = vmatpush.msra.mxu0 0.0
    %1431 = vmatpush.msra.mxu0 0.0
    %1432 = vmatpush.msra.mxu0 0.0
    %1433 = vmatpush.msra.mxu0 0.0
    %1434 = vmatpush.msra.mxu0 0.0
    %1435 = vmatpush.msra.mxu0 0.0
    %1436 = vmatpush.msra.mxu0 0.0
    %1437 = vmatpush.msra.mxu0 0.0
    %1438 = vmatpush.msra.mxu0 0.0
    %1439 = vmatpush.msra.mxu0 0.0
    %1440 = vmatpush.msra.mxu0 0.0
    %1441 = vmatpush.msra.mxu0 %v40
    %1442 = vmatpush.msra.mxu0 %v39
    %1443 = vmatpush.msra.mxu0 %v38
    %1444 = vmatpush.msra.mxu0 %v37
    %1445 = vmatmul.f32.gmra.mxu0 %v1427
    %v1446 = vpop.f32.mrf.mxu0
    %v1447 = vadd.f32 %v43, %v1446
    %1448 = vdwg.mxu0
    %v1449 = vxor.u32 %v1447, 2147483648
    %v1450 = vmul.f32 %v1449, 1.442695
    %v1451 = vpow.pop %v1450
    %v1452 = vadd.f32 %v1451, 1.0
    %v1453 = vrcp.pop %v1452
    %v1454 = vmul.f32 %v1452, %v1453
    %v1455 = vsub.f32 1.0, %v1454
    %v1456 = vmul.f32 %v1453, %v1455
    %v1457 = vadd.f32 %v1453, %v1456
    %vm1458 = vweird.f32 %v1452
    %vm1459 = vweird.f32 %v1453
    %vm1460 = vmor %vm1458, %vm1459
    %v1461 = vsel %vm1460, %v1453, %v1457
    %v1462 = vand.u32 2147483647, %v1452
    %vm1463 = vcmp.eq.f32.partialorder %v1462, 8.507059e+37
    %v1464 = vand.u32 %v1452, 2147483648
    %v1465 = vor.u32 1.1754944e-38, %v1464
    %v1466 = vsel %vm1463, %v1465, %v1461
    %v1467 = vmul.f32 1.0, %v1466
    %v1468 = vtanh.pop %v1447
    %v1469 = vmul.f32 %v1467, %v1406
    %1471 = vrot.lane.b32.xlu0 %v1468, 64
    %v1472 = vpop.permute.xlu0 %1471
    %v1474 = vmul.f32 %v1467, %v1472
    %1476 = vrot.lane.b32.xlu0 %v1474, 32
    %v1477 = vpop.permute.xlu0 %1476
    %v1479 = vadd.f32 %v1469, %v1477
    %v1480 = vtanh.pop %v1479
    %1482 = vrot.lane.b32.xlu0 %v1480, 64
    %v1483 = vpop.permute.xlu0 %1482
    %v1485 = vmul.f32 %v1467, %v1483
    %v1487 = vrot.slane %v1485, 1
    %v1488 = vperm.slane %v1485, 0
    %v1489 = vperm.slane %v1487, 0
    %1490 = vrot.lane.b32.xlu0 %v1488, 32
    %v1491 = vpop.permute.xlu0 %1490
    %1492 = vrot.lane.b32.xlu0 %v1489, 32
    %v1493 = vpop.permute.xlu0 %1492
    %1496 = vst.msk [vmem:[#allocation3] sm:$0x1] %vm969, %v1491
    %1497 = vst.msk [vmem:[#allocation3 + $0x8] sm:$0x1] %vm969, %v1493
    %v1498 = vld [vmem:[#allocation3] sm:$0xff]
    %v1499 = vld [vmem:[#allocation3 + $0x8] sm:$0xff]
    %v1500 = vld [vmem:[%s6] sm:$0xff]
    %v1501 = vld [vmem:[%s6 + $0x8] sm:$0xff]
    %v1502 = vld [vmem:[%s6 + $0x10] sm:$0xff]
    %v1503 = vld [vmem:[%s6 + $0x18] sm:$0xff]
    %v1504 = vld [vmem:[%s7] sm:$0x1]
    %v1506 = vperm.slane %v1504, 0
    %v1509 = vsel %vm86, %v1498, 0
    %v1512 = vsel %vm86, %v1499, 0
    %1514 = vmatpush.msra.mxu0 0.0
    %1515 = vmatpush.msra.mxu0 0.0
    %1516 = vmatpush.msra.mxu0 0.0
    %1517 = vmatpush.msra.mxu0 0.0
    %1518 = vmatpush.msra.mxu0 0.0
    %1519 = vmatpush.msra.mxu0 0.0
    %1520 = vmatpush.msra.mxu0 0.0
    %1521 = vmatpush.msra.mxu0 0.0
    %1522 = vmatpush.msra.mxu0 0.0
    %1523 = vmatpush.msra.mxu0 0.0
    %1524 = vmatpush.msra.mxu0 0.0
    %1525 = vmatpush.msra.mxu0 0.0
    %1526 = vmatpush.msra.mxu0 %v1503
    %1527 = vmatpush.msra.mxu0 %v1502
    %1528 = vmatpush.msra.mxu0 %v1501
    %1529 = vmatpush.msra.mxu0 %v1500
    %1530 = vmatmul.f32.gmra.mxu0 %v1509
    %v1531 = vpop.f32.mrf.mxu0
    %v1532 = vadd.f32 %v1506, %v1531
    %1533 = vmatmul.f32.gmra.mxu0 %v1512
    %v1534 = vpop.f32.mrf.mxu0
    %v1535 = vadd.f32 %v1506, %v1534
    %1536 = vdwg.mxu0
    %1537 = vst.msk [vmem:[#allocation4] sm:$0xff] %vm52, %v1532
    %1538 = vst.msk [vmem:[#allocation4 + $0x8] sm:$0xff] %vm52, %v1535
    // Predicated region
    $region34: #{lstmed_forward.1} parent=1 // pred_check
      _
    $region35: #{lstmed_forward.1} parent=1 // pred_check_branch
      %1540 = sbr.rel (0) target = $region37
    $region36: #{lstmed_forward.1} parent=1 // pred_region
      %1542 = vsyncadd [#allocation5], 0
      %s1543 = sshll.u32 [#allocation4], 4
      %s1544 = int_to_ptr.vmem [resolvable:$true] %s1543
      %s1545 = sshll.u32 %s8, 4
      %s1546 = int_to_ptr.hbm [resolvable:$true] %s1545
      %1551 = dma.vmem_to_hbm [thread:$0]  %s1544, 256, %s1546, [#allocation5], 128, 128, 8
    $region37: #{lstmed_forward.1} parent=1 // pred_fallthru
      _
    // Predicated region
    $region38: #{lstmed_forward.1} parent=1 // pred_check
      _
    $region39: #{lstmed_forward.1} parent=1 // pred_check_branch
      %1553 = sbr.rel (0) target = $region41
    $region40: #{lstmed_forward.1} parent=1 // pred_region
      %1555 = vsyncadd [#allocation7], 0
      %s1556 = sshll.u32 [#allocation6], 4
      %s1557 = int_to_ptr.vmem [resolvable:$true] %s1556
      %s1558 = sshll.u32 %s9, 4
      %s1559 = int_to_ptr.hbm [resolvable:$true] %s1558
      %1564 = dma.vmem_to_hbm [thread:$0]  %s1557, 32, %s1559, [#allocation7], 16, 16, 1
    $region41: #{lstmed_forward.1} parent=1 // pred_fallthru
      _
    // Predicated region
    $region42: #{lstmed_forward.1} parent=1 // pred_check
      _
    $region43: #{lstmed_forward.1} parent=1 // pred_check_branch
      %1566 = sbr.rel (0) target = $region45
    $region44: #{lstmed_forward.1} parent=1 // pred_region
      %1568 = dma.done [#allocation5], 256
    $region45: #{lstmed_forward.1} parent=1 // pred_fallthru
      _
    // Predicated region
    $region46: #{lstmed_forward.1} parent=1 // pred_check
      _
    $region47: #{lstmed_forward.1} parent=1 // pred_check_branch
      %1570 = sbr.rel (0) target = $region49
    $region48: #{lstmed_forward.1} parent=1 // pred_region
      %1572 = dma.done [#allocation7], 32
    $region49: #{lstmed_forward.1} parent=1 // pred_fallthru
      _
    %1573 = vsyncpa [#allocation5], 1
    %1574 = vsyncpa [#allocation7], 1

</llo_original>
